<compile_context>
chip_gen: v6e
topology: v6e:2x2x1
jax: 0.10.0
libtpu: 0.0.40
codegen_flags: <defaults>
</compile_context>

<pallas_src>
import functools

import numpy as np
import jax
import jax.numpy as jnp
from jax.experimental import pallas as pl
from jax.experimental.pallas import tpu as pltpu


# --------------------------------------------------------------------------
# In-kernel helpers
# --------------------------------------------------------------------------
def _tree_block_max(x, n_blocks, block_rows):
    """Max over `n_blocks` contiguous row-blocks of `block_rows` rows each.

    Pairwise (log-depth) tree so the VPU dependency chain stays short.
    Works on VMEM refs (slicing loads) and on in-register values alike.
    """
    parts = [x[t * block_rows:(t + 1) * block_rows, :] for t in range(n_blocks)]
    while len(parts) > 1:
        nxt = [jnp.maximum(parts[i], parts[i + 1])
               for i in range(0, len(parts) - 1, 2)]
        if len(parts) % 2:
            nxt.append(parts[-1])
        parts = nxt
    return parts[0]


# --------------------------------------------------------------------------
# The fused kernel (single pallas_call, no grid)
# --------------------------------------------------------------------------
def _structddi_kernel(featcol_ref, structcol_ref, wf_ref, bf_ref, ws_ref, bs_ref,
                      wt_ref, bt_ref, w1_ref, b1_ref, w2_ref, b2_ref,
                      w3_ref, b3_ref, wout_ref, bout_ref, out_ref,
                      feat_scr, struct_scr, *,
                      n_feat_blocks, n_struct_blocks, group_pad, n_wo,
                      batch, cs, cf):
    two_b = 2 * batch

    # ---- Conv3d as im2col matmul (bf16 in / f32 acc) + bias + ReLU ----------
    feat_scr[...] = jnp.maximum(
        jnp.dot(featcol_ref[...], wf_ref[...],
                preferred_element_type=jnp.float32) + bf_ref[...], 0.0)
    # AdaptiveMaxPool3d((1,1,None)): rows ordered (do,ho | wo,drug,b).
    # Blocks are sublane-aligned (group_pad % 8 == 0); log-depth max tree.
    pooled_f = _tree_block_max(feat_scr, n_feat_blocks, group_pad)

    # ---- Conv2d as im2col matmul + bias + ReLU, AdaptiveMaxPool2d((1,None)) --
    struct_scr[...] = jnp.maximum(
        jnp.dot(structcol_ref[...], ws_ref[...],
                preferred_element_type=jnp.float32) + bs_ref[...], 0.0)
    pooled_s = _tree_block_max(struct_scr, n_struct_blocks, group_pad)

    # ---- transform_layer(concat([struct, feat], channel)) -------------------
    # Split-weight matmul == Linear(concat(...)); struct channels first, as in
    # torch.cat((conv_struct, conv_feat), dim=1).
    tr = (jnp.dot(pooled_s, wt_ref[0:cs, :], preferred_element_type=jnp.float32)
          + jnp.dot(pooled_f, wt_ref[cs:cs + cf, :],
                    preferred_element_type=jnp.float32)
          + bt_ref[...])

    # ---- Global max pool over Wo (rows (wo, drug, b)) ------------------------
    # Only the first n_wo*2B rows are real; padded rows never enter this max.
    g = _tree_block_max(tr, n_wo, two_b)              # [2B, Ct], rows (drug, b)

    # ---- torch.add(drug1, drug2) + MLP head ----------------------------------
    h = g[0:batch, :] + g[batch:two_b, :]
    # TODO(synk): Dropout is identity here (inference mode only).
    h = jnp.maximum(jnp.dot(h, w1_ref[...],
                            preferred_element_type=jnp.float32) + b1_ref[...], 0.0)
    h = jnp.maximum(jnp.dot(h, w2_ref[...],
                            preferred_element_type=jnp.float32) + b2_ref[...], 0.0)
    h = jnp.maximum(jnp.dot(h, w3_ref[...],
                            preferred_element_type=jnp.float32) + b3_ref[...], 0.0)
    logits = (jnp.dot(h, wout_ref[...], preferred_element_type=jnp.float32)
              + bout_ref[...])
    # LogSoftmax(dim=1), numerically stable.
    m = jnp.max(logits, axis=-1, keepdims=True)
    z = logits - m
    out_ref[...] = z - jnp.log(jnp.sum(jnp.exp(z), axis=-1, keepdims=True))


# --------------------------------------------------------------------------
# pallas_call wrapper
# --------------------------------------------------------------------------
_VMEM_SPEC = pl.BlockSpec(memory_space=pltpu.MemorySpace.VMEM)


def pallas_struct_ddi(featcol, structcol, params, *, batch, n_wo,
                      n_feat_blocks, n_struct_blocks, group_pad):
    """Whole StructDDI forward in one kernel.  Returns [B, classes] log-probs."""
    m_f, kdim_f = featcol.shape
    m_s, kdim_s = structcol.shape
    cf = params["feat_w"].shape[1]
    cs = params["struct_w"].shape[1]
    ct = params["trans_w"].shape[1]
    h1 = params["fc1_w"].shape[1]
    h2 = params["fc2_w"].shape[1]
    h3 = params["fc3_w"].shape[1]
    nc = params["out_w"].shape[1]
    assert m_f == n_feat_blocks * group_pad and m_s == n_struct_blocks * group_pad
    assert group_pad % 8 == 0 and n_wo * 2 * batch <= group_pad

    kernel = functools.partial(
        _structddi_kernel,
        n_feat_blocks=n_feat_blocks, n_struct_blocks=n_struct_blocks,
        group_pad=group_pad, n_wo=n_wo, batch=batch, cs=cs, cf=cf)

    flops = 2 * (m_f * kdim_f * cf + m_s * kdim_s * cs
                 + group_pad * (cs + cf) * ct
                 + batch * (ct * h1 + h1 * h2 + h2 * h3 + h3 * nc))
    bytes_accessed = (featcol.size * featcol.dtype.itemsize
                      + structcol.size * structcol.dtype.itemsize
                      + 4 * (kdim_f * cf + kdim_s * cs + (cs + cf) * ct
                             + ct * h1 + h1 * h2 + h2 * h3 + h3 * nc
                             + batch * nc))

    return pl.pallas_call(
        kernel,
        out_shape=jax.ShapeDtypeStruct((batch, nc), jnp.float32),
        in_specs=[_VMEM_SPEC] * 16,
        out_specs=_VMEM_SPEC,
        scratch_shapes=[
            pltpu.VMEM((m_f, cf), jnp.float32),    # feat conv output
            pltpu.VMEM((m_s, cs), jnp.float32),    # struct conv output
        ],
        cost_estimate=pl.CostEstimate(flops=flops, transcendentals=2 * batch * nc,
                                      bytes_accessed=bytes_accessed),
    )(featcol, structcol, params["feat_w"], params["feat_b"],
      params["struct_w"], params["struct_b"], params["trans_w"], params["trans_b"],
      params["fc1_w"], params["fc1_b"], params["fc2_w"], params["fc2_b"],
      params["fc3_w"], params["fc3_b"], params["out_w"], params["out_b"])


# --------------------------------------------------------------------------
# Patch-extraction glue (single XLA op per conv, both drugs stacked)
# --------------------------------------------------------------------------
def _patches_3d(x, k):
    """x: [G, B, C, D, H, W] -> [Do*Ho, Wo*G*B, C*k^3], cols (c, kd, kh, kw)."""
    g_, b_, c_, d_, h_, w_ = x.shape
    do, ho, wo = d_ - k + 1, h_ - k + 1, w_ - k + 1
    p = jax.lax.conv_general_dilated_patches(
        x.reshape(g_ * b_, c_, d_, h_, w_), (k, k, k), (1, 1, 1), "VALID")
    # p: [G*B, C*k^3, Do, Ho, Wo]; feature order (c, kd, kh, kw) matches the
    # reshaped Conv3d weight [Cout, C*k^3].
    p = p.reshape(g_, b_, c_ * k ** 3, do, ho, wo)
    p = p.transpose(3, 4, 5, 0, 1, 2)                       # [Do,Ho,Wo,G,B,K]
    return p.reshape(do * ho, wo * g_ * b_, c_ * k ** 3), (do, ho, wo)


def _patches_2d(x, k):
    """x: [G, B, C, H, W] -> [Ho, Wo*G*B, C*k^2], cols (c, kh, kw)."""
    g_, b_, c_, h_, w_ = x.shape
    ho, wo = h_ - k + 1, w_ - k + 1
    p = jax.lax.conv_general_dilated_patches(
        x.reshape(g_ * b_, c_, h_, w_), (k, k), (1, 1), "VALID")
    p = p.reshape(g_, b_, c_ * k ** 2, ho, wo)
    p = p.transpose(3, 4, 0, 1, 2)                          # [Ho,Wo,G,B,K]
    return p.reshape(ho, wo * g_ * b_, c_ * k ** 2), (ho, wo)


def _flatten_rows(p, group_pad):
    """[n_blocks, group, K] -> [n_blocks*group_pad, K] with zero-row padding.

    Padded rows sit in KEPT dimensions of the conv pools (harmless after ReLU)
    and are excluded from the final Wo max-pool inside the kernel.
    """
    n_blocks, group, kdim = p.shape
    if group_pad > group:
        p = jnp.pad(p, ((0, 0), (0, group_pad - group), (0, 0)))
    return p.reshape(n_blocks * group_pad, kdim)


# --------------------------------------------------------------------------
# StructDDI forward
# --------------------------------------------------------------------------
def struct_ddi_forward(params, graph_struct1, graph_struct2,
                       graph_feat1, graph_feat2, *,
                       feat_kernel=3, struct_kernel=3):
    batch = graph_feat1.shape[0]

    # graph_feat*: [B, W, D, H, Cin] --permute(0,4,2,3,1)--> [B, Cin, D, H, W]
    feats = jnp.stack([graph_feat1, graph_feat2], axis=0)            # [2,B,W,D,H,C]
    feats = feats.transpose(0, 1, 5, 3, 4, 2).astype(jnp.bfloat16)   # [2,B,C,D,H,W]

    # Embedding lookup + permute(0,3,2,1): [B,S1,S2] -> [B,E,S2,S1]
    structs = jnp.stack([graph_struct1, graph_struct2], axis=0)      # [2,B,S1,S2]
    emb = params["emb"][structs]                                     # [2,B,S1,S2,E]
    emb = emb.transpose(0, 1, 4, 3, 2).astype(jnp.bfloat16)          # [2,B,E,S2,S1]

    featcol3, (do, ho, wo) = _patches_3d(feats, feat_kernel)
    structcol3, (hs, ws) = _patches_2d(emb, struct_kernel)
    assert ws == wo, "struct / feat conv output widths must match for concat"

    group = featcol3.shape[1]                  # = Wo * 2 * B
    group_pad = ((group + 7) // 8) * 8         # sublane-align pooling blocks
    featcol = _flatten_rows(featcol3, group_pad)
    structcol = _flatten_rows(structcol3, group_pad)

    return pallas_struct_ddi(featcol, structcol, params, batch=batch, n_wo=wo,
                             n_feat_blocks=do * ho, n_struct_blocks=hs,
                             group_pad=group_pad)


# --------------------------------------------------------------------------
# Deterministic parameter init (synthetic, shapes per the module __init__)
# --------------------------------------------------------------------------
def xavier_uniform(key, shape, fan_in, fan_out):
    bound = float(np.sqrt(6.0 / (fan_in + fan_out)))
    return jax.random.uniform(key, shape, jnp.float32, -bound, bound)


def make_params():
    para = dict(
        structure_embedding_number=10,
        struct_channel_list=[6, 8], struct_filter_sizes=[3],
        feat_channel_list=[4, 8], feat_filter_sizes=[3],
        conv_output_channel=16, class_number=4, mlp_sizes=[32, 16, 8],
    )
    keys = jax.random.split(jax.random.PRNGKey(0), 12)
    cs_in, cs_out, ks = para["struct_channel_list"][0], para["struct_channel_list"][1], 3
    cf_in, cf_out, kf = para["feat_channel_list"][0], para["feat_channel_list"][1], 3
    ct = para["conv_output_channel"]
    m0, m1, m2 = para["mlp_sizes"]
    nc = para["class_number"]
    return {
        "emb": jax.random.uniform(keys[0], (para["structure_embedding_number"], cs_in),
                                  jnp.float32, 0.0, 1.0),
        "struct_w": xavier_uniform(keys[1], (cs_out, cs_in, ks, ks),
                                   cs_in * ks * ks, cs_out * ks * ks),
        "struct_b": jnp.full((cs_out,), 0.1, jnp.float32),
        "feat_w": xavier_uniform(keys[2], (cf_out, cf_in, kf, kf, kf),
                                 cf_in * kf ** 3, cf_out * kf ** 3),
        "feat_b": jnp.full((cf_out,), 0.1, jnp.float32),
        # dense weights stored as [in, out] so kernels compute x @ W + b
        "trans_w": xavier_uniform(keys[3], (cs_out + cf_out, ct), cs_out + cf_out, ct),
        "trans_b": jnp.zeros((ct,), jnp.float32),
        "fc1_w": xavier_uniform(keys[4], (ct, m0), ct, m0),
        "fc1_b": jnp.zeros((m0,), jnp.float32),
        "fc2_w": xavier_uniform(keys[5], (m0, m1), m0, m1),
        "fc2_b": jnp.zeros((m1,), jnp.float32),
        "fc3_w": xavier_uniform(keys[6], (m1, m2), m1, m2),
        "fc3_b": jnp.zeros((m2,), jnp.float32),
        "out_w": jax.random.normal(keys[7], (m2, nc), jnp.float32),
        "out_b": jax.random.uniform(keys[8], (nc,), jnp.float32,
                                    -1.0 / np.sqrt(m2), 1.0 / np.sqrt(m2)),
    }


def prepare_params(raw):
    """One-time preprocessing: matmul-form conv weights (bf16) + [1,N] f32 biases."""
    cf_out = raw["feat_w"].shape[0]
    cs_out = raw["struct_w"].shape[0]
    bias = lambda b: b.reshape(1, -1).astype(jnp.float32)
    return {
        "emb": raw["emb"].astype(jnp.float32),
        "feat_w": raw["feat_w"].reshape(cf_out, -1).T.astype(jnp.bfloat16),
        "feat_b": bias(raw["feat_b"]),
        "struct_w": raw["struct_w"].reshape(cs_out, -1).T.astype(jnp.bfloat16),
        "struct_b": bias(raw["struct_b"]),
        "trans_w": raw["trans_w"].astype(jnp.float32), "trans_b": bias(raw["trans_b"]),
        "fc1_w": raw["fc1_w"].astype(jnp.float32), "fc1_b": bias(raw["fc1_b"]),
        "fc2_w": raw["fc2_w"].astype(jnp.float32), "fc2_b": bias(raw["fc2_b"]),
        "fc3_w": raw["fc3_w"].astype(jnp.float32), "fc3_b": bias(raw["fc3_b"]),
        "out_w": raw["out_w"].astype(jnp.float32), "out_b": bias(raw["out_b"]),
    }


if __name__ == "__main__":
    params = prepare_params(make_params())
    forward = jax.jit(struct_ddi_forward)

    key = jax.random.PRNGKey(0)
    k1, k2, k3, k4 = jax.random.split(key, 4)
    B = 2
    # graph_feat: [B, W=8, D=8, H=8, Cin=4]  (permuted to NCDHW inside forward)
    graph_feat1 = jax.random.normal(k1, (B, 8, 8, 8, 4), jnp.float32)
    graph_feat2 = jax.random.normal(k2, (B, 8, 8, 8, 4), jnp.float32)
    # graph_struct: [B, 8, 8] int32 indices into the structure embedding table
    graph_struct1 = jax.random.randint(k3, (B, 8, 8), 0, 10, jnp.int32)
    graph_struct2 = jax.random.randint(k4, (B, 8, 8), 0, 10, jnp.int32)

    out = forward(params, graph_struct1, graph_struct2, graph_feat1, graph_feat2)
    out = jax.block_until_ready(out)
    assert out.shape == (B, 4)
    # log-softmax rows must (approximately) exponentiate-sum to 1
    assert np.allclose(np.exp(np.asarray(out)).sum(axis=1), 1.0, atol=1e-4)
    print("KERNEL_OK")
</pallas_src>

<mosaic_0001>
module attributes {stable_mosaic.version = 11 : i64} {
  func.func @_structddi_kernel(%arg0: memref<864x108xbf16, #tpu.memory_space<vmem>>, %arg1: memref<144x54xbf16, #tpu.memory_space<vmem>>, %arg2: memref<108x8xbf16, #tpu.memory_space<vmem>>, %arg3: memref<1x8xf32, #tpu.memory_space<vmem>>, %arg4: memref<54x8xbf16, #tpu.memory_space<vmem>>, %arg5: memref<1x8xf32, #tpu.memory_space<vmem>>, %arg6: memref<16x16xf32, #tpu.memory_space<vmem>>, %arg7: memref<1x16xf32, #tpu.memory_space<vmem>>, %arg8: memref<16x32xf32, #tpu.memory_space<vmem>>, %arg9: memref<1x32xf32, #tpu.memory_space<vmem>>, %arg10: memref<32x16xf32, #tpu.memory_space<vmem>>, %arg11: memref<1x16xf32, #tpu.memory_space<vmem>>, %arg12: memref<16x8xf32, #tpu.memory_space<vmem>>, %arg13: memref<1x8xf32, #tpu.memory_space<vmem>>, %arg14: memref<8x4xf32, #tpu.memory_space<vmem>>, %arg15: memref<1x4xf32, #tpu.memory_space<vmem>>, %arg16: memref<2x4xf32, #tpu.memory_space<vmem>>, %arg17: memref<864x8xf32, #tpu.memory_space<vmem>>, %arg18: memref<144x8xf32, #tpu.memory_space<vmem>>) attributes {dimension_semantics = [], scalar_prefetch = 0 : i64, scratch_operands = 2 : i64, tpu.core_type = #tpu.core_type<tc>} {
    %c0 = arith.constant 0 : index
    %c0_0 = arith.constant 0 : index
    %0 = vector.load %arg0[%c0, %c0_0] : memref<864x108xbf16, #tpu.memory_space<vmem>>, vector<864x108xbf16>
    %c0_1 = arith.constant 0 : index
    %c0_2 = arith.constant 0 : index
    %1 = vector.load %arg2[%c0_1, %c0_2] : memref<108x8xbf16, #tpu.memory_space<vmem>>, vector<108x8xbf16>
    %cst = arith.constant dense<0.000000e+00> : vector<864x8xf32>
    %2 = tpu.matmul %0, %1, %cst {dimension_numbers = #tpu.dot_dimension_numbers<[1], [0], [0], [1], [0, 0, 1, 1], [], []>} : vector<864x108xbf16>, vector<108x8xbf16>, vector<864x8xf32> -> vector<864x8xf32>
    %c0_3 = arith.constant 0 : index
    %c0_4 = arith.constant 0 : index
    %3 = vector.load %arg3[%c0_3, %c0_4] : memref<1x8xf32, #tpu.memory_space<vmem>>, vector<1x8xf32>
    %4 = vector.broadcast %3 : vector<1x8xf32> to vector<864x8xf32>
    %5 = arith.addf %2, %4 : vector<864x8xf32>
    %cst_5 = arith.constant 0.000000e+00 : f32
    %6 = vector.broadcast %cst_5 : f32 to vector<864x8xf32>
    %7 = arith.maximumf %5, %6 : vector<864x8xf32>
    %c0_6 = arith.constant 0 : index
    %c0_7 = arith.constant 0 : index
    %8 = vector.load %arg17[%c0_6, %c0_7] : memref<864x8xf32, #tpu.memory_space<vmem>>, vector<864x8xf32>
    tpu.vector_store %arg17[%c0_6, %c0_7], %7 {strides = array<i32>} : memref<864x8xf32, #tpu.memory_space<vmem>>, vector<864x8xf32>,
    %c0_8 = arith.constant 0 : index
    %c0_9 = arith.constant 0 : index
    %9 = vector.load %arg17[%c0_8, %c0_9] : memref<864x8xf32, #tpu.memory_space<vmem>>, vector<24x8xf32>
    %c24 = arith.constant 24 : index
    %c0_10 = arith.constant 0 : index
    %10 = vector.load %arg17[%c24, %c0_10] : memref<864x8xf32, #tpu.memory_space<vmem>>, vector<24x8xf32>
    %c48 = arith.constant 48 : index
    %c0_11 = arith.constant 0 : index
    %11 = vector.load %arg17[%c48, %c0_11] : memref<864x8xf32, #tpu.memory_space<vmem>>, vector<24x8xf32>
    %c72 = arith.constant 72 : index
    %c0_12 = arith.constant 0 : index
    %12 = vector.load %arg17[%c72, %c0_12] : memref<864x8xf32, #tpu.memory_space<vmem>>, vector<24x8xf32>
    %c96 = arith.constant 96 : index
    %c0_13 = arith.constant 0 : index
    %13 = vector.load %arg17[%c96, %c0_13] : memref<864x8xf32, #tpu.memory_space<vmem>>, vector<24x8xf32>
    %c120 = arith.constant 120 : index
    %c0_14 = arith.constant 0 : index
    %14 = vector.load %arg17[%c120, %c0_14] : memref<864x8xf32, #tpu.memory_space<vmem>>, vector<24x8xf32>
    %c144 = arith.constant 144 : index
    %c0_15 = arith.constant 0 : index
    %15 = vector.load %arg17[%c144, %c0_15] : memref<864x8xf32, #tpu.memory_space<vmem>>, vector<24x8xf32>
    %c168 = arith.constant 168 : index
    %c0_16 = arith.constant 0 : index
    %16 = vector.load %arg17[%c168, %c0_16] : memref<864x8xf32, #tpu.memory_space<vmem>>, vector<24x8xf32>
    %c192 = arith.constant 192 : index
    %c0_17 = arith.constant 0 : index
    %17 = vector.load %arg17[%c192, %c0_17] : memref<864x8xf32, #tpu.memory_space<vmem>>, vector<24x8xf32>
    %c216 = arith.constant 216 : index
    %c0_18 = arith.constant 0 : index
    %18 = vector.load %arg17[%c216, %c0_18] : memref<864x8xf32, #tpu.memory_space<vmem>>, vector<24x8xf32>
    %c240 = arith.constant 240 : index
    %c0_19 = arith.constant 0 : index
    %19 = vector.load %arg17[%c240, %c0_19] : memref<864x8xf32, #tpu.memory_space<vmem>>, vector<24x8xf32>
    %c264 = arith.constant 264 : index
    %c0_20 = arith.constant 0 : index
    %20 = vector.load %arg17[%c264, %c0_20] : memref<864x8xf32, #tpu.memory_space<vmem>>, vector<24x8xf32>
    %c288 = arith.constant 288 : index
    %c0_21 = arith.constant 0 : index
    %21 = vector.load %arg17[%c288, %c0_21] : memref<864x8xf32, #tpu.memory_space<vmem>>, vector<24x8xf32>
    %c312 = arith.constant 312 : index
    %c0_22 = arith.constant 0 : index
    %22 = vector.load %arg17[%c312, %c0_22] : memref<864x8xf32, #tpu.memory_space<vmem>>, vector<24x8xf32>
    %c336 = arith.constant 336 : index
    %c0_23 = arith.constant 0 : index
    %23 = vector.load %arg17[%c336, %c0_23] : memref<864x8xf32, #tpu.memory_space<vmem>>, vector<24x8xf32>
    %c360 = arith.constant 360 : index
    %c0_24 = arith.constant 0 : index
    %24 = vector.load %arg17[%c360, %c0_24] : memref<864x8xf32, #tpu.memory_space<vmem>>, vector<24x8xf32>
    %c384 = arith.constant 384 : index
    %c0_25 = arith.constant 0 : index
    %25 = vector.load %arg17[%c384, %c0_25] : memref<864x8xf32, #tpu.memory_space<vmem>>, vector<24x8xf32>
    %c408 = arith.constant 408 : index
    %c0_26 = arith.constant 0 : index
    %26 = vector.load %arg17[%c408, %c0_26] : memref<864x8xf32, #tpu.memory_space<vmem>>, vector<24x8xf32>
    %c432 = arith.constant 432 : index
    %c0_27 = arith.constant 0 : index
    %27 = vector.load %arg17[%c432, %c0_27] : memref<864x8xf32, #tpu.memory_space<vmem>>, vector<24x8xf32>
    %c456 = arith.constant 456 : index
    %c0_28 = arith.constant 0 : index
    %28 = vector.load %arg17[%c456, %c0_28] : memref<864x8xf32, #tpu.memory_space<vmem>>, vector<24x8xf32>
    %c480 = arith.constant 480 : index
    %c0_29 = arith.constant 0 : index
    %29 = vector.load %arg17[%c480, %c0_29] : memref<864x8xf32, #tpu.memory_space<vmem>>, vector<24x8xf32>
    %c504 = arith.constant 504 : index
    %c0_30 = arith.constant 0 : index
    %30 = vector.load %arg17[%c504, %c0_30] : memref<864x8xf32, #tpu.memory_space<vmem>>, vector<24x8xf32>
    %c528 = arith.constant 528 : index
    %c0_31 = arith.constant 0 : index
    %31 = vector.load %arg17[%c528, %c0_31] : memref<864x8xf32, #tpu.memory_space<vmem>>, vector<24x8xf32>
    %c552 = arith.constant 552 : index
    %c0_32 = arith.constant 0 : index
    %32 = vector.load %arg17[%c552, %c0_32] : memref<864x8xf32, #tpu.memory_space<vmem>>, vector<24x8xf32>
    %c576 = arith.constant 576 : index
    %c0_33 = arith.constant 0 : index
    %33 = vector.load %arg17[%c576, %c0_33] : memref<864x8xf32, #tpu.memory_space<vmem>>, vector<24x8xf32>
    %c600 = arith.constant 600 : index
    %c0_34 = arith.constant 0 : index
    %34 = vector.load %arg17[%c600, %c0_34] : memref<864x8xf32, #tpu.memory_space<vmem>>, vector<24x8xf32>
    %c624 = arith.constant 624 : index
    %c0_35 = arith.constant 0 : index
    %35 = vector.load %arg17[%c624, %c0_35] : memref<864x8xf32, #tpu.memory_space<vmem>>, vector<24x8xf32>
    %c648 = arith.constant 648 : index
    %c0_36 = arith.constant 0 : index
    %36 = vector.load %arg17[%c648, %c0_36] : memref<864x8xf32, #tpu.memory_space<vmem>>, vector<24x8xf32>
    %c672 = arith.constant 672 : index
    %c0_37 = arith.constant 0 : index
    %37 = vector.load %arg17[%c672, %c0_37] : memref<864x8xf32, #tpu.memory_space<vmem>>, vector<24x8xf32>
    %c696 = arith.constant 696 : index
    %c0_38 = arith.constant 0 : index
    %38 = vector.load %arg17[%c696, %c0_38] : memref<864x8xf32, #tpu.memory_space<vmem>>, vector<24x8xf32>
    %c720 = arith.constant 720 : index
    %c0_39 = arith.constant 0 : index
    %39 = vector.load %arg17[%c720, %c0_39] : memref<864x8xf32, #tpu.memory_space<vmem>>, vector<24x8xf32>
    %c744 = arith.constant 744 : index
    %c0_40 = arith.constant 0 : index
    %40 = vector.load %arg17[%c744, %c0_40] : memref<864x8xf32, #tpu.memory_space<vmem>>, vector<24x8xf32>
    %c768 = arith.constant 768 : index
    %c0_41 = arith.constant 0 : index
    %41 = vector.load %arg17[%c768, %c0_41] : memref<864x8xf32, #tpu.memory_space<vmem>>, vector<24x8xf32>
    %c792 = arith.constant 792 : index
    %c0_42 = arith.constant 0 : index
    %42 = vector.load %arg17[%c792, %c0_42] : memref<864x8xf32, #tpu.memory_space<vmem>>, vector<24x8xf32>
    %c816 = arith.constant 816 : index
    %c0_43 = arith.constant 0 : index
    %43 = vector.load %arg17[%c816, %c0_43] : memref<864x8xf32, #tpu.memory_space<vmem>>, vector<24x8xf32>
    %c840 = arith.constant 840 : index
    %c0_44 = arith.constant 0 : index
    %44 = vector.load %arg17[%c840, %c0_44] : memref<864x8xf32, #tpu.memory_space<vmem>>, vector<24x8xf32>
    %45 = arith.maximumf %9, %10 : vector<24x8xf32>
    %46 = arith.maximumf %11, %12 : vector<24x8xf32>
    %47 = arith.maximumf %13, %14 : vector<24x8xf32>
    %48 = arith.maximumf %15, %16 : vector<24x8xf32>
    %49 = arith.maximumf %17, %18 : vector<24x8xf32>
    %50 = arith.maximumf %19, %20 : vector<24x8xf32>
    %51 = arith.maximumf %21, %22 : vector<24x8xf32>
    %52 = arith.maximumf %23, %24 : vector<24x8xf32>
    %53 = arith.maximumf %25, %26 : vector<24x8xf32>
    %54 = arith.maximumf %27, %28 : vector<24x8xf32>
    %55 = arith.maximumf %29, %30 : vector<24x8xf32>
    %56 = arith.maximumf %31, %32 : vector<24x8xf32>
    %57 = arith.maximumf %33, %34 : vector<24x8xf32>
    %58 = arith.maximumf %35, %36 : vector<24x8xf32>
    %59 = arith.maximumf %37, %38 : vector<24x8xf32>
    %60 = arith.maximumf %39, %40 : vector<24x8xf32>
    %61 = arith.maximumf %41, %42 : vector<24x8xf32>
    %62 = arith.maximumf %43, %44 : vector<24x8xf32>
    %63 = arith.maximumf %45, %46 : vector<24x8xf32>
    %64 = arith.maximumf %47, %48 : vector<24x8xf32>
    %65 = arith.maximumf %49, %50 : vector<24x8xf32>
    %66 = arith.maximumf %51, %52 : vector<24x8xf32>
    %67 = arith.maximumf %53, %54 : vector<24x8xf32>
    %68 = arith.maximumf %55, %56 : vector<24x8xf32>
    %69 = arith.maximumf %57, %58 : vector<24x8xf32>
    %70 = arith.maximumf %59, %60 : vector<24x8xf32>
    %71 = arith.maximumf %61, %62 : vector<24x8xf32>
    %72 = arith.maximumf %63, %64 : vector<24x8xf32>
    %73 = arith.maximumf %65, %66 : vector<24x8xf32>
    %74 = arith.maximumf %67, %68 : vector<24x8xf32>
    %75 = arith.maximumf %69, %70 : vector<24x8xf32>
    %76 = arith.maximumf %72, %73 : vector<24x8xf32>
    %77 = arith.maximumf %74, %75 : vector<24x8xf32>
    %78 = arith.maximumf %76, %77 : vector<24x8xf32>
    %79 = arith.maximumf %78, %71 : vector<24x8xf32>
    %c0_45 = arith.constant 0 : index
    %c0_46 = arith.constant 0 : index
    %80 = vector.load %arg1[%c0_45, %c0_46] : memref<144x54xbf16, #tpu.memory_space<vmem>>, vector<144x54xbf16>
    %c0_47 = arith.constant 0 : index
    %c0_48 = arith.constant 0 : index
    %81 = vector.load %arg4[%c0_47, %c0_48] : memref<54x8xbf16, #tpu.memory_space<vmem>>, vector<54x8xbf16>
    %cst_49 = arith.constant dense<0.000000e+00> : vector<144x8xf32>
    %82 = tpu.matmul %80, %81, %cst_49 {dimension_numbers = #tpu.dot_dimension_numbers<[1], [0], [0], [1], [0, 0, 1, 1], [], []>} : vector<144x54xbf16>, vector<54x8xbf16>, vector<144x8xf32> -> vector<144x8xf32>
    %c0_50 = arith.constant 0 : index
    %c0_51 = arith.constant 0 : index
    %83 = vector.load %arg5[%c0_50, %c0_51] : memref<1x8xf32, #tpu.memory_space<vmem>>, vector<1x8xf32>
    %84 = vector.broadcast %83 : vector<1x8xf32> to vector<144x8xf32>
    %85 = arith.addf %82, %84 : vector<144x8xf32>
    %cst_52 = arith.constant 0.000000e+00 : f32
    %86 = vector.broadcast %cst_52 : f32 to vector<144x8xf32>
    %87 = arith.maximumf %85, %86 : vector<144x8xf32>
    %c0_53 = arith.constant 0 : index
    %c0_54 = arith.constant 0 : index
    %88 = vector.load %arg18[%c0_53, %c0_54] : memref<144x8xf32, #tpu.memory_space<vmem>>, vector<144x8xf32>
    tpu.vector_store %arg18[%c0_53, %c0_54], %87 {strides = array<i32>} : memref<144x8xf32, #tpu.memory_space<vmem>>, vector<144x8xf32>,
    %c0_55 = arith.constant 0 : index
    %c0_56 = arith.constant 0 : index
    %89 = vector.load %arg18[%c0_55, %c0_56] : memref<144x8xf32, #tpu.memory_space<vmem>>, vector<24x8xf32>
    %c24_57 = arith.constant 24 : index
    %c0_58 = arith.constant 0 : index
    %90 = vector.load %arg18[%c24_57, %c0_58] : memref<144x8xf32, #tpu.memory_space<vmem>>, vector<24x8xf32>
    %c48_59 = arith.constant 48 : index
    %c0_60 = arith.constant 0 : index
    %91 = vector.load %arg18[%c48_59, %c0_60] : memref<144x8xf32, #tpu.memory_space<vmem>>, vector<24x8xf32>
    %c72_61 = arith.constant 72 : index
    %c0_62 = arith.constant 0 : index
    %92 = vector.load %arg18[%c72_61, %c0_62] : memref<144x8xf32, #tpu.memory_space<vmem>>, vector<24x8xf32>
    %c96_63 = arith.constant 96 : index
    %c0_64 = arith.constant 0 : index
    %93 = vector.load %arg18[%c96_63, %c0_64] : memref<144x8xf32, #tpu.memory_space<vmem>>, vector<24x8xf32>
    %c120_65 = arith.constant 120 : index
    %c0_66 = arith.constant 0 : index
    %94 = vector.load %arg18[%c120_65, %c0_66] : memref<144x8xf32, #tpu.memory_space<vmem>>, vector<24x8xf32>
    %95 = arith.maximumf %89, %90 : vector<24x8xf32>
    %96 = arith.maximumf %91, %92 : vector<24x8xf32>
    %97 = arith.maximumf %93, %94 : vector<24x8xf32>
    %98 = arith.maximumf %95, %96 : vector<24x8xf32>
    %99 = arith.maximumf %98, %97 : vector<24x8xf32>
    %c0_67 = arith.constant 0 : index
    %c0_68 = arith.constant 0 : index
    %100 = vector.load %arg6[%c0_67, %c0_68] : memref<16x16xf32, #tpu.memory_space<vmem>>, vector<8x16xf32>
    %cst_69 = arith.constant dense<0.000000e+00> : vector<24x16xf32>
    %101 = tpu.matmul %99, %100, %cst_69 {dimension_numbers = #tpu.dot_dimension_numbers<[1], [0], [0], [1], [0, 0, 1, 1], [], []>} : vector<24x8xf32>, vector<8x16xf32>, vector<24x16xf32> -> vector<24x16xf32>
    %c8 = arith.constant 8 : index
    %c0_70 = arith.constant 0 : index
    %102 = vector.load %arg6[%c8, %c0_70] : memref<16x16xf32, #tpu.memory_space<vmem>>, vector<8x16xf32>
    %cst_71 = arith.constant dense<0.000000e+00> : vector<24x16xf32>
    %103 = tpu.matmul %79, %102, %cst_71 {dimension_numbers = #tpu.dot_dimension_numbers<[1], [0], [0], [1], [0, 0, 1, 1], [], []>} : vector<24x8xf32>, vector<8x16xf32>, vector<24x16xf32> -> vector<24x16xf32>
    %104 = arith.addf %101, %103 : vector<24x16xf32>
    %c0_72 = arith.constant 0 : index
    %c0_73 = arith.constant 0 : index
    %105 = vector.load %arg7[%c0_72, %c0_73] : memref<1x16xf32, #tpu.memory_space<vmem>>, vector<1x16xf32>
    %106 = vector.broadcast %105 : vector<1x16xf32> to vector<24x16xf32>
    %107 = arith.addf %104, %106 : vector<24x16xf32>
    %108 = vector.extract_strided_slice %107 {offsets = [0, 0], sizes = [4, 16], strides = [1, 1]} : vector<24x16xf32> to vector<4x16xf32>
    %109 = vector.extract_strided_slice %107 {offsets = [4, 0], sizes = [4, 16], strides = [1, 1]} : vector<24x16xf32> to vector<4x16xf32>
    %110 = vector.extract_strided_slice %107 {offsets = [8, 0], sizes = [4, 16], strides = [1, 1]} : vector<24x16xf32> to vector<4x16xf32>
    %111 = vector.extract_strided_slice %107 {offsets = [12, 0], sizes = [4, 16], strides = [1, 1]} : vector<24x16xf32> to vector<4x16xf32>
    %112 = vector.extract_strided_slice %107 {offsets = [16, 0], sizes = [4, 16], strides = [1, 1]} : vector<24x16xf32> to vector<4x16xf32>
    %113 = vector.extract_strided_slice %107 {offsets = [20, 0], sizes = [4, 16], strides = [1, 1]} : vector<24x16xf32> to vector<4x16xf32>
    %114 = arith.maximumf %108, %109 : vector<4x16xf32>
    %115 = arith.maximumf %110, %111 : vector<4x16xf32>
    %116 = arith.maximumf %112, %113 : vector<4x16xf32>
    %117 = arith.maximumf %114, %115 : vector<4x16xf32>
    %118 = arith.maximumf %117, %116 : vector<4x16xf32>
    %119 = vector.extract_strided_slice %118 {offsets = [0, 0], sizes = [2, 16], strides = [1, 1]} : vector<4x16xf32> to vector<2x16xf32>
    %120 = vector.extract_strided_slice %118 {offsets = [2, 0], sizes = [2, 16], strides = [1, 1]} : vector<4x16xf32> to vector<2x16xf32>
    %121 = arith.addf %119, %120 : vector<2x16xf32>
    %c0_74 = arith.constant 0 : index
    %c0_75 = arith.constant 0 : index
    %122 = vector.load %arg8[%c0_74, %c0_75] : memref<16x32xf32, #tpu.memory_space<vmem>>, vector<16x32xf32>
    %cst_76 = arith.constant dense<0.000000e+00> : vector<2x32xf32>
    %123 = tpu.matmul %121, %122, %cst_76 {dimension_numbers = #tpu.dot_dimension_numbers<[1], [0], [0], [1], [0, 0, 1, 1], [], []>} : vector<2x16xf32>, vector<16x32xf32>, vector<2x32xf32> -> vector<2x32xf32>
    %c0_77 = arith.constant 0 : index
    %c0_78 = arith.constant 0 : index
    %124 = vector.load %arg9[%c0_77, %c0_78] : memref<1x32xf32, #tpu.memory_space<vmem>>, vector<1x32xf32>
    %125 = vector.broadcast %124 : vector<1x32xf32> to vector<2x32xf32>
    %126 = arith.addf %123, %125 : vector<2x32xf32>
    %cst_79 = arith.constant 0.000000e+00 : f32
    %127 = vector.broadcast %cst_79 : f32 to vector<2x32xf32>
    %128 = arith.maximumf %126, %127 : vector<2x32xf32>
    %c0_80 = arith.constant 0 : index
    %c0_81 = arith.constant 0 : index
    %129 = vector.load %arg10[%c0_80, %c0_81] : memref<32x16xf32, #tpu.memory_space<vmem>>, vector<32x16xf32>
    %cst_82 = arith.constant dense<0.000000e+00> : vector<2x16xf32>
    %130 = tpu.matmul %128, %129, %cst_82 {dimension_numbers = #tpu.dot_dimension_numbers<[1], [0], [0], [1], [0, 0, 1, 1], [], []>} : vector<2x32xf32>, vector<32x16xf32>, vector<2x16xf32> -> vector<2x16xf32>
    %c0_83 = arith.constant 0 : index
    %c0_84 = arith.constant 0 : index
    %131 = vector.load %arg11[%c0_83, %c0_84] : memref<1x16xf32, #tpu.memory_space<vmem>>, vector<1x16xf32>
    %132 = vector.broadcast %131 : vector<1x16xf32> to vector<2x16xf32>
    %133 = arith.addf %130, %132 : vector<2x16xf32>
    %cst_85 = arith.constant 0.000000e+00 : f32
    %134 = vector.broadcast %cst_85 : f32 to vector<2x16xf32>
    %135 = arith.maximumf %133, %134 : vector<2x16xf32>
    %c0_86 = arith.constant 0 : index
    %c0_87 = arith.constant 0 : index
    %136 = vector.load %arg12[%c0_86, %c0_87] : memref<16x8xf32, #tpu.memory_space<vmem>>, vector<16x8xf32>
    %cst_88 = arith.constant dense<0.000000e+00> : vector<2x8xf32>
    %137 = tpu.matmul %135, %136, %cst_88 {dimension_numbers = #tpu.dot_dimension_numbers<[1], [0], [0], [1], [0, 0, 1, 1], [], []>} : vector<2x16xf32>, vector<16x8xf32>, vector<2x8xf32> -> vector<2x8xf32>
    %c0_89 = arith.constant 0 : index
    %c0_90 = arith.constant 0 : index
    %138 = vector.load %arg13[%c0_89, %c0_90] : memref<1x8xf32, #tpu.memory_space<vmem>>, vector<1x8xf32>
    %139 = vector.broadcast %138 : vector<1x8xf32> to vector<2x8xf32>
    %140 = arith.addf %137, %139 : vector<2x8xf32>
    %cst_91 = arith.constant 0.000000e+00 : f32
    %141 = vector.broadcast %cst_91 : f32 to vector<2x8xf32>
    %142 = arith.maximumf %140, %141 : vector<2x8xf32>
    %c0_92 = arith.constant 0 : index
    %c0_93 = arith.constant 0 : index
    %143 = vector.load %arg14[%c0_92, %c0_93] : memref<8x4xf32, #tpu.memory_space<vmem>>, vector<8x4xf32>
    %cst_94 = arith.constant dense<0.000000e+00> : vector<2x4xf32>
    %144 = tpu.matmul %142, %143, %cst_94 {dimension_numbers = #tpu.dot_dimension_numbers<[1], [0], [0], [1], [0, 0, 1, 1], [], []>} : vector<2x8xf32>, vector<8x4xf32>, vector<2x4xf32> -> vector<2x4xf32>
    %c0_95 = arith.constant 0 : index
    %c0_96 = arith.constant 0 : index
    %145 = vector.load %arg15[%c0_95, %c0_96] : memref<1x4xf32, #tpu.memory_space<vmem>>, vector<1x4xf32>
    %146 = vector.broadcast %145 : vector<1x4xf32> to vector<2x4xf32>
    %147 = arith.addf %144, %146 : vector<2x4xf32>
    %cst_97 = arith.constant dense<0xFF800000> : vector<2xf32>
    %148 = vector.multi_reduction <maximumf>, %147, %cst_97 [1] : vector<2x4xf32> to vector<2xf32>
    %149 = vector.shape_cast %148 : vector<2xf32> to vector<2x1xf32>
    %150 = vector.broadcast %149 : vector<2x1xf32> to vector<2x4xf32>
    %151 = arith.subf %147, %150 : vector<2x4xf32>
    %152 = math.exp %151 : vector<2x4xf32>
    %cst_98 = arith.constant dense<0.000000e+00> : vector<2xf32>
    %153 = vector.multi_reduction <add>, %152, %cst_98 [1] : vector<2x4xf32> to vector<2xf32>
    %154 = vector.shape_cast %153 : vector<2xf32> to vector<2x1xf32>
    %155 = math.log %154 : vector<2x1xf32>
    %156 = vector.broadcast %155 : vector<2x1xf32> to vector<2x4xf32>
    %157 = arith.subf %151, %156 : vector<2x4xf32>
    %c0_99 = arith.constant 0 : index
    %c0_100 = arith.constant 0 : index
    %158 = vector.load %arg16[%c0_99, %c0_100] : memref<2x4xf32, #tpu.memory_space<vmem>>, vector<2x4xf32>
    tpu.vector_store %arg16[%c0_99, %c0_100], %157 {strides = array<i32>} : memref<2x4xf32, #tpu.memory_space<vmem>>, vector<2x4xf32>,
    return
  }
}

</mosaic_0001>

<llo_original>
// kernel: struct_ddi_forward.1
$region0: #{struct_ddi_forward.1}
  #allocation0 [shape = 'u32[]', space=smem, size = 0x4, offset = 0x4, fixed_abs, tag = 'smem constant byte address 0x4 - core index']
  #allocation1 [shape = 'u32[144,128]{1,0:T(1,128)}', space=vmem, size = 0x12000, scoped, tag = 'internal scratch']
  #allocation2 [shape = 'f32[864,8]{1,0:T(8,128)}', space=vmem, size = 0x6c000, scoped, tag = 'scratch operand']
  #allocation3 [shape = 'f32[144,8]{1,0:T(8,128)}', space=vmem, size = 0x12000, scoped, tag = 'scratch operand']
  %s0 = inlined_call_operand.vmem [shape: bf16[864,108], index: 0, kind: input, shape index: {}]
  %s1 = inlined_call_operand.vmem [shape: bf16[144,54], index: 1, kind: input, shape index: {}]
  %s2 = inlined_call_operand.vmem [shape: bf16[108,8], index: 2, kind: input, shape index: {}]
  %s3 = inlined_call_operand.vmem [shape: f32[1,8], index: 3, kind: input, shape index: {}]
  %s4 = inlined_call_operand.vmem [shape: bf16[54,8], index: 4, kind: input, shape index: {}]
  %s5 = inlined_call_operand.vmem [shape: f32[1,8], index: 5, kind: input, shape index: {}]
  %s6 = inlined_call_operand.vmem [shape: f32[16,16], index: 6, kind: input, shape index: {}]
  %s7 = inlined_call_operand.vmem [shape: f32[1,16], index: 7, kind: input, shape index: {}]
  %s8 = inlined_call_operand.vmem [shape: f32[16,32], index: 8, kind: input, shape index: {}]
  %s9 = inlined_call_operand.vmem [shape: f32[1,32], index: 9, kind: input, shape index: {}]
  %s10 = inlined_call_operand.vmem [shape: f32[32,16], index: 10, kind: input, shape index: {}]
  %s11 = inlined_call_operand.vmem [shape: f32[1,16], index: 11, kind: input, shape index: {}]
  %s12 = inlined_call_operand.vmem [shape: f32[16,8], index: 12, kind: input, shape index: {}]
  %s13 = inlined_call_operand.vmem [shape: f32[1,8], index: 13, kind: input, shape index: {}]
  %s14 = inlined_call_operand.vmem [shape: f32[8,4], index: 14, kind: input, shape index: {}]
  %s15 = inlined_call_operand.vmem [shape: f32[1,4], index: 15, kind: input, shape index: {}]
  %s16 = inlined_call_operand.hbm [shape: f32[2,4], index: 16, kind: output, shape index: {}]
  %s17 = sld [smem:[#allocation0]]
  $region74: #{struct_ddi_forward.1} parent=0
    _
  %s19 = ssub.s32 1, %s17
  %s20 = scalar_select 0, %s19, %s17
  $region1: #{struct_ddi_forward.1} parent=0
    #allocation4 [shape = 'u8[1024]{0}', space=vmem, size = 0x400, scoped, tag = 'output window, operand 0, single buffered']
    #allocation5 [shape = 's32[1]{0}', space=sflag, size = 0x4, scoped, tag = 'scoped memory for struct_ddi_forward.1']
    %21 = vsyncpa [#allocation5], 0
    // Predicated region
    $region2: #{struct_ddi_forward.1} parent=1 // pred_check
      _
    $region3: #{struct_ddi_forward.1} parent=1 // pred_check_branch
      %23 = sbr.rel (0) target = $region5
    $region4: #{struct_ddi_forward.1} parent=1 // pred_region
      _
    $region5: #{struct_ddi_forward.1} parent=1 // pred_fallthru
      _
    // Predicated region
    $region6: #{struct_ddi_forward.1} parent=1 // pred_check
      _
    $region7: #{struct_ddi_forward.1} parent=1 // pred_check_branch
      %25 = sbr.rel (0) target = $region9
    $region8: #{struct_ddi_forward.1} parent=1 // pred_region
      _
    $region9: #{struct_ddi_forward.1} parent=1 // pred_fallthru
      _
    // Predicated region
    $region10: #{struct_ddi_forward.1} parent=1 // pred_check
      _
    $region11: #{struct_ddi_forward.1} parent=1 // pred_check_branch
      %27 = sbr.rel (0) target = $region13
    $region12: #{struct_ddi_forward.1} parent=1 // pred_region
      _
    $region13: #{struct_ddi_forward.1} parent=1 // pred_fallthru
      _
    // Predicated region
    $region14: #{struct_ddi_forward.1} parent=1 // pred_check
      _
    $region15: #{struct_ddi_forward.1} parent=1 // pred_check_branch
      %29 = sbr.rel (0) target = $region17
    $region16: #{struct_ddi_forward.1} parent=1 // pred_region
      _
    $region17: #{struct_ddi_forward.1} parent=1 // pred_fallthru
      _
    // Predicated region
    $region18: #{struct_ddi_forward.1} parent=1 // pred_check
      _
    $region19: #{struct_ddi_forward.1} parent=1 // pred_check_branch
      %31 = sbr.rel (0) target = $region21
    $region20: #{struct_ddi_forward.1} parent=1 // pred_region
      _
    $region21: #{struct_ddi_forward.1} parent=1 // pred_fallthru
      _
    // Predicated region
    $region22: #{struct_ddi_forward.1} parent=1 // pred_check
      _
    $region23: #{struct_ddi_forward.1} parent=1 // pred_check_branch
      %33 = sbr.rel (0) target = $region25
    $region24: #{struct_ddi_forward.1} parent=1 // pred_region
      _
    $region25: #{struct_ddi_forward.1} parent=1 // pred_fallthru
      _
    // Predicated region
    $region26: #{struct_ddi_forward.1} parent=1 // pred_check
      _
    $region27: #{struct_ddi_forward.1} parent=1 // pred_check_branch
      %35 = sbr.rel (0) target = $region29
    $region28: #{struct_ddi_forward.1} parent=1 // pred_region
      _
    $region29: #{struct_ddi_forward.1} parent=1 // pred_fallthru
      _
    // Predicated region
    $region30: #{struct_ddi_forward.1} parent=1 // pred_check
      _
    $region31: #{struct_ddi_forward.1} parent=1 // pred_check_branch
      %37 = sbr.rel (0) target = $region33
    $region32: #{struct_ddi_forward.1} parent=1 // pred_region
      _
    $region33: #{struct_ddi_forward.1} parent=1 // pred_fallthru
      _
    // Predicated region
    $region34: #{struct_ddi_forward.1} parent=1 // pred_check
      _
    $region35: #{struct_ddi_forward.1} parent=1 // pred_check_branch
      %39 = sbr.rel (0) target = $region37
    $region36: #{struct_ddi_forward.1} parent=1 // pred_region
      _
    $region37: #{struct_ddi_forward.1} parent=1 // pred_fallthru
      _
    // Predicated region
    $region38: #{struct_ddi_forward.1} parent=1 // pred_check
      _
    $region39: #{struct_ddi_forward.1} parent=1 // pred_check_branch
      %41 = sbr.rel (0) target = $region41
    $region40: #{struct_ddi_forward.1} parent=1 // pred_region
      _
    $region41: #{struct_ddi_forward.1} parent=1 // pred_fallthru
      _
    // Predicated region
    $region42: #{struct_ddi_forward.1} parent=1 // pred_check
      _
    $region43: #{struct_ddi_forward.1} parent=1 // pred_check_branch
      %43 = sbr.rel (0) target = $region45
    $region44: #{struct_ddi_forward.1} parent=1 // pred_region
      _
    $region45: #{struct_ddi_forward.1} parent=1 // pred_fallthru
      _
    // Predicated region
    $region46: #{struct_ddi_forward.1} parent=1 // pred_check
      _
    $region47: #{struct_ddi_forward.1} parent=1 // pred_check_branch
      %45 = sbr.rel (0) target = $region49
    $region48: #{struct_ddi_forward.1} parent=1 // pred_region
      _
    $region49: #{struct_ddi_forward.1} parent=1 // pred_fallthru
      _
    // Predicated region
    $region50: #{struct_ddi_forward.1} parent=1 // pred_check
      _
    $region51: #{struct_ddi_forward.1} parent=1 // pred_check_branch
      %47 = sbr.rel (0) target = $region53
    $region52: #{struct_ddi_forward.1} parent=1 // pred_region
      _
    $region53: #{struct_ddi_forward.1} parent=1 // pred_fallthru
      _
    // Predicated region
    $region54: #{struct_ddi_forward.1} parent=1 // pred_check
      _
    $region55: #{struct_ddi_forward.1} parent=1 // pred_check_branch
      %49 = sbr.rel (0) target = $region57
    $region56: #{struct_ddi_forward.1} parent=1 // pred_region
      _
    $region57: #{struct_ddi_forward.1} parent=1 // pred_fallthru
      _
    // Predicated region
    $region58: #{struct_ddi_forward.1} parent=1 // pred_check
      _
    $region59: #{struct_ddi_forward.1} parent=1 // pred_check_branch
      %51 = sbr.rel (0) target = $region61
    $region60: #{struct_ddi_forward.1} parent=1 // pred_region
      _
    $region61: #{struct_ddi_forward.1} parent=1 // pred_fallthru
      _
    // Predicated region
    $region62: #{struct_ddi_forward.1} parent=1 // pred_check
      _
    $region63: #{struct_ddi_forward.1} parent=1 // pred_check_branch
      %53 = sbr.rel (0) target = $region65
    $region64: #{struct_ddi_forward.1} parent=1 // pred_region
      _
    $region65: #{struct_ddi_forward.1} parent=1 // pred_fallthru
      _
    %v55 = vld [vmem:[%s0] sm:$0xf]
    %v56 = vld [vmem:[%s0 + $0x4] sm:$0xf]
    %v57 = vld [vmem:[%s0 + $0x8] sm:$0xf]
    %v58 = vld [vmem:[%s0 + $0xc] sm:$0xf]
    %v59 = vld [vmem:[%s0 + $0x10] sm:$0xf]
    %v60 = vld [vmem:[%s0 + $0x14] sm:$0xf]
    %v61 = vld [vmem:[%s0 + $0x18] sm:$0xf]
    %v62 = vld [vmem:[%s0 + $0x1c] sm:$0xf]
    %v63 = vld [vmem:[%s0 + $0x20] sm:$0xf]
    %v64 = vld [vmem:[%s0 + $0x24] sm:$0xf]
    %v65 = vld [vmem:[%s0 + $0x28] sm:$0xf]
    %v66 = vld [vmem:[%s0 + $0x2c] sm:$0xf]
    %v67 = vld [vmem:[%s0 + $0x30] sm:$0xf]
    %v68 = vld [vmem:[%s0 + $0x34] sm:$0xf]
    %v69 = vld [vmem:[%s0 + $0x38] sm:$0xf]
    %v70 = vld [vmem:[%s0 + $0x3c] sm:$0xf]
    %v71 = vld [vmem:[%s0 + $0x40] sm:$0xf]
    %v72 = vld [vmem:[%s0 + $0x44] sm:$0xf]
    %v73 = vld [vmem:[%s0 + $0x48] sm:$0xf]
    %v74 = vld [vmem:[%s0 + $0x4c] sm:$0xf]
    %v75 = vld [vmem:[%s0 + $0x50] sm:$0xf]
    %v76 = vld [vmem:[%s0 + $0x54] sm:$0xf]
    %v77 = vld [vmem:[%s0 + $0x58] sm:$0xf]
    %v78 = vld [vmem:[%s0 + $0x5c] sm:$0xf]
    %v79 = vld [vmem:[%s0 + $0x60] sm:$0xf]
    %v80 = vld [vmem:[%s0 + $0x64] sm:$0xf]
    %v81 = vld [vmem:[%s0 + $0x68] sm:$0xf]
    %v82 = vld [vmem:[%s0 + $0x6c] sm:$0xf]
    %v83 = vld [vmem:[%s0 + $0x70] sm:$0xf]
    %v84 = vld [vmem:[%s0 + $0x74] sm:$0xf]
    %v85 = vld [vmem:[%s0 + $0x78] sm:$0xf]
    %v86 = vld [vmem:[%s0 + $0x7c] sm:$0xf]
    %v87 = vld [vmem:[%s0 + $0x80] sm:$0xf]
    %v88 = vld [vmem:[%s0 + $0x84] sm:$0xf]
    %v89 = vld [vmem:[%s0 + $0x88] sm:$0xf]
    %v90 = vld [vmem:[%s0 + $0x8c] sm:$0xf]
    %v91 = vld [vmem:[%s0 + $0x90] sm:$0xf]
    %v92 = vld [vmem:[%s0 + $0x94] sm:$0xf]
    %v93 = vld [vmem:[%s0 + $0x98] sm:$0xf]
    %v94 = vld [vmem:[%s0 + $0x9c] sm:$0xf]
    %v95 = vld [vmem:[%s0 + $0xa0] sm:$0xf]
    %v96 = vld [vmem:[%s0 + $0xa4] sm:$0xf]
    %v97 = vld [vmem:[%s0 + $0xa8] sm:$0xf]
    %v98 = vld [vmem:[%s0 + $0xac] sm:$0xf]
    %v99 = vld [vmem:[%s0 + $0xb0] sm:$0xf]
    %v100 = vld [vmem:[%s0 + $0xb4] sm:$0xf]
    %v101 = vld [vmem:[%s0 + $0xb8] sm:$0xf]
    %v102 = vld [vmem:[%s0 + $0xbc] sm:$0xf]
    %v103 = vld [vmem:[%s0 + $0xc0] sm:$0xf]
    %v104 = vld [vmem:[%s0 + $0xc4] sm:$0xf]
    %v105 = vld [vmem:[%s0 + $0xc8] sm:$0xf]
    %v106 = vld [vmem:[%s0 + $0xcc] sm:$0xf]
    %v107 = vld [vmem:[%s0 + $0xd0] sm:$0xf]
    %v108 = vld [vmem:[%s0 + $0xd4] sm:$0xf]
    %v109 = vld [vmem:[%s0 + $0xd8] sm:$0xf]
    %v110 = vld [vmem:[%s0 + $0xdc] sm:$0xf]
    %v111 = vld [vmem:[%s0 + $0xe0] sm:$0xf]
    %v112 = vld [vmem:[%s0 + $0xe4] sm:$0xf]
    %v113 = vld [vmem:[%s0 + $0xe8] sm:$0xf]
    %v114 = vld [vmem:[%s0 + $0xec] sm:$0xf]
    %v115 = vld [vmem:[%s0 + $0xf0] sm:$0xf]
    %v116 = vld [vmem:[%s0 + $0xf4] sm:$0xf]
    %v117 = vld [vmem:[%s0 + $0xf8] sm:$0xf]
    %v118 = vld [vmem:[%s0 + $0xfc] sm:$0xf]
    %v119 = vld [vmem:[%s0 + $0x100] sm:$0xf]
    %v120 = vld [vmem:[%s0 + $0x104] sm:$0xf]
    %v121 = vld [vmem:[%s0 + $0x108] sm:$0xf]
    %v122 = vld [vmem:[%s0 + $0x10c] sm:$0xf]
    %v123 = vld [vmem:[%s0 + $0x110] sm:$0xf]
    %v124 = vld [vmem:[%s0 + $0x114] sm:$0xf]
    %v125 = vld [vmem:[%s0 + $0x118] sm:$0xf]
    %v126 = vld [vmem:[%s0 + $0x11c] sm:$0xf]
    %v127 = vld [vmem:[%s0 + $0x120] sm:$0xf]
    %v128 = vld [vmem:[%s0 + $0x124] sm:$0xf]
    %v129 = vld [vmem:[%s0 + $0x128] sm:$0xf]
    %v130 = vld [vmem:[%s0 + $0x12c] sm:$0xf]
    %v131 = vld [vmem:[%s0 + $0x130] sm:$0xf]
    %v132 = vld [vmem:[%s0 + $0x134] sm:$0xf]
    %v133 = vld [vmem:[%s0 + $0x138] sm:$0xf]
    %v134 = vld [vmem:[%s0 + $0x13c] sm:$0xf]
    %v135 = vld [vmem:[%s0 + $0x140] sm:$0xf]
    %v136 = vld [vmem:[%s0 + $0x144] sm:$0xf]
    %v137 = vld [vmem:[%s0 + $0x148] sm:$0xf]
    %v138 = vld [vmem:[%s0 + $0x14c] sm:$0xf]
    %v139 = vld [vmem:[%s0 + $0x150] sm:$0xf]
    %v140 = vld [vmem:[%s0 + $0x154] sm:$0xf]
    %v141 = vld [vmem:[%s0 + $0x158] sm:$0xf]
    %v142 = vld [vmem:[%s0 + $0x15c] sm:$0xf]
    %v143 = vld [vmem:[%s0 + $0x160] sm:$0xf]
    %v144 = vld [vmem:[%s0 + $0x164] sm:$0xf]
    %v145 = vld [vmem:[%s0 + $0x168] sm:$0xf]
    %v146 = vld [vmem:[%s0 + $0x16c] sm:$0xf]
    %v147 = vld [vmem:[%s0 + $0x170] sm:$0xf]
    %v148 = vld [vmem:[%s0 + $0x174] sm:$0xf]
    %v149 = vld [vmem:[%s0 + $0x178] sm:$0xf]
    %v150 = vld [vmem:[%s0 + $0x17c] sm:$0xf]
    %v151 = vld [vmem:[%s0 + $0x180] sm:$0xf]
    %v152 = vld [vmem:[%s0 + $0x184] sm:$0xf]
    %v153 = vld [vmem:[%s0 + $0x188] sm:$0xf]
    %v154 = vld [vmem:[%s0 + $0x18c] sm:$0xf]
    %v155 = vld [vmem:[%s0 + $0x190] sm:$0xf]
    %v156 = vld [vmem:[%s0 + $0x194] sm:$0xf]
    %v157 = vld [vmem:[%s0 + $0x198] sm:$0xf]
    %v158 = vld [vmem:[%s0 + $0x19c] sm:$0xf]
    %v159 = vld [vmem:[%s0 + $0x1a0] sm:$0xf]
    %v160 = vld [vmem:[%s0 + $0x1a4] sm:$0xf]
    %v161 = vld [vmem:[%s0 + $0x1a8] sm:$0xf]
    %v162 = vld [vmem:[%s0 + $0x1ac] sm:$0xf]
    %v163 = vld [vmem:[%s2] sm:$0xf]
    %v164 = vld [vmem:[%s2 + $0x4] sm:$0xf]
    %v165 = vld [vmem:[%s2 + $0x8] sm:$0xf]
    %v166 = vld [vmem:[%s2 + $0xc] sm:$0xf]
    %v167 = vld [vmem:[%s2 + $0x10] sm:$0xf]
    %v168 = vld [vmem:[%s2 + $0x14] sm:$0xf]
    %v169 = vld [vmem:[%s2 + $0x18] sm:$0xf]
    %v170 = vld [vmem:[%s2 + $0x1c] sm:$0xf]
    %v171 = vld [vmem:[%s2 + $0x20] sm:$0xf]
    %v172 = vld [vmem:[%s2 + $0x24] sm:$0xf]
    %v173 = vld [vmem:[%s2 + $0x28] sm:$0xf]
    %v174 = vld [vmem:[%s2 + $0x2c] sm:$0xf]
    %v175 = vld [vmem:[%s2 + $0x30] sm:$0xf]
    %v176 = vld [vmem:[%s2 + $0x34] sm:$0x3]
    %v177 = vld [vmem:[%s3] sm:$0x1]
    %v179 = vlaneseq
    %v180 = vshrl.u32 %v179, 7
    %v181 = vsub.s32 0, %v180
    %v182 = vrot.slane %v177, %v181
    %v292 = vunpack.c.l.b16 %v55
    %v293 = vunpack.c.l.b16 %v56
    %v294 = vunpack.c.l.b16 %v57
    %v295 = vunpack.c.l.b16 %v58
    %v296 = vunpack.c.l.b16 %v59
    %v297 = vunpack.c.l.b16 %v60
    %v298 = vunpack.c.l.b16 %v61
    %v299 = vunpack.c.l.b16 %v62
    %v300 = vunpack.c.l.b16 %v63
    %v301 = vunpack.c.l.b16 %v64
    %v302 = vunpack.c.l.b16 %v65
    %v303 = vunpack.c.l.b16 %v66
    %v304 = vunpack.c.l.b16 %v67
    %v305 = vunpack.c.l.b16 %v68
    %v306 = vunpack.c.l.b16 %v69
    %v307 = vunpack.c.l.b16 %v70
    %v308 = vunpack.c.l.b16 %v71
    %v309 = vunpack.c.l.b16 %v72
    %v310 = vunpack.c.l.b16 %v73
    %v311 = vunpack.c.l.b16 %v74
    %v312 = vunpack.c.l.b16 %v75
    %v313 = vunpack.c.l.b16 %v76
    %v314 = vunpack.c.l.b16 %v77
    %v315 = vunpack.c.l.b16 %v78
    %v316 = vunpack.c.l.b16 %v79
    %v317 = vunpack.c.l.b16 %v80
    %v318 = vunpack.c.l.b16 %v81
    %v319 = vunpack.c.l.b16 %v82
    %v320 = vunpack.c.l.b16 %v83
    %v321 = vunpack.c.l.b16 %v84
    %v322 = vunpack.c.l.b16 %v85
    %v323 = vunpack.c.l.b16 %v86
    %v324 = vunpack.c.l.b16 %v87
    %v325 = vunpack.c.l.b16 %v88
    %v326 = vunpack.c.l.b16 %v89
    %v327 = vunpack.c.l.b16 %v90
    %v328 = vunpack.c.l.b16 %v91
    %v329 = vunpack.c.l.b16 %v92
    %v330 = vunpack.c.l.b16 %v93
    %v331 = vunpack.c.l.b16 %v94
    %v332 = vunpack.c.l.b16 %v95
    %v333 = vunpack.c.l.b16 %v96
    %v334 = vunpack.c.l.b16 %v97
    %v335 = vunpack.c.l.b16 %v98
    %v336 = vunpack.c.l.b16 %v99
    %v337 = vunpack.c.l.b16 %v100
    %v338 = vunpack.c.l.b16 %v101
    %v339 = vunpack.c.l.b16 %v102
    %v340 = vunpack.c.l.b16 %v103
    %v341 = vunpack.c.l.b16 %v104
    %v342 = vunpack.c.l.b16 %v105
    %v343 = vunpack.c.l.b16 %v106
    %v344 = vunpack.c.l.b16 %v107
    %v345 = vunpack.c.l.b16 %v108
    %v346 = vunpack.c.l.b16 %v109
    %v347 = vunpack.c.l.b16 %v110
    %v348 = vunpack.c.l.b16 %v111
    %v349 = vunpack.c.l.b16 %v112
    %v350 = vunpack.c.l.b16 %v113
    %v351 = vunpack.c.l.b16 %v114
    %v352 = vunpack.c.l.b16 %v115
    %v353 = vunpack.c.l.b16 %v116
    %v354 = vunpack.c.l.b16 %v117
    %v355 = vunpack.c.l.b16 %v118
    %v356 = vunpack.c.l.b16 %v119
    %v357 = vunpack.c.l.b16 %v120
    %v358 = vunpack.c.l.b16 %v121
    %v359 = vunpack.c.l.b16 %v122
    %v360 = vunpack.c.l.b16 %v123
    %v361 = vunpack.c.l.b16 %v124
    %v362 = vunpack.c.l.b16 %v125
    %v363 = vunpack.c.l.b16 %v126
    %v364 = vunpack.c.l.b16 %v127
    %v365 = vunpack.c.l.b16 %v128
    %v366 = vunpack.c.l.b16 %v129
    %v367 = vunpack.c.l.b16 %v130
    %v368 = vunpack.c.l.b16 %v131
    %v369 = vunpack.c.l.b16 %v132
    %v370 = vunpack.c.l.b16 %v133
    %v371 = vunpack.c.l.b16 %v134
    %v372 = vunpack.c.l.b16 %v135
    %v373 = vunpack.c.l.b16 %v136
    %v374 = vunpack.c.l.b16 %v137
    %v375 = vunpack.c.l.b16 %v138
    %v376 = vunpack.c.l.b16 %v139
    %v377 = vunpack.c.l.b16 %v140
    %v378 = vunpack.c.l.b16 %v141
    %v379 = vunpack.c.l.b16 %v142
    %v380 = vunpack.c.l.b16 %v143
    %v381 = vunpack.c.l.b16 %v144
    %v382 = vunpack.c.l.b16 %v145
    %v383 = vunpack.c.l.b16 %v146
    %v384 = vunpack.c.l.b16 %v147
    %v385 = vunpack.c.l.b16 %v148
    %v386 = vunpack.c.l.b16 %v149
    %v387 = vunpack.c.l.b16 %v150
    %v388 = vunpack.c.l.b16 %v151
    %v389 = vunpack.c.l.b16 %v152
    %v390 = vunpack.c.l.b16 %v153
    %v391 = vunpack.c.l.b16 %v154
    %v392 = vunpack.c.l.b16 %v155
    %v393 = vunpack.c.l.b16 %v156
    %v394 = vunpack.c.l.b16 %v157
    %v395 = vunpack.c.l.b16 %v158
    %v396 = vunpack.c.l.b16 %v159
    %v397 = vunpack.c.l.b16 %v160
    %v398 = vunpack.c.l.b16 %v161
    %v399 = vunpack.c.l.b16 %v162
    %v400 = vpack.c.b16 %v293, %v292
    %v401 = vpack.c.b16 %v295, %v294
    %v402 = vpack.c.b16 %v297, %v296
    %v403 = vpack.c.b16 %v299, %v298
    %v404 = vpack.c.b16 %v301, %v300
    %v405 = vpack.c.b16 %v303, %v302
    %v406 = vpack.c.b16 %v305, %v304
    %v407 = vpack.c.b16 %v307, %v306
    %v408 = vpack.c.b16 %v309, %v308
    %v409 = vpack.c.b16 %v311, %v310
    %v410 = vpack.c.b16 %v313, %v312
    %v411 = vpack.c.b16 %v315, %v314
    %v412 = vpack.c.b16 %v317, %v316
    %v413 = vpack.c.b16 %v319, %v318
    %v414 = vpack.c.b16 %v321, %v320
    %v415 = vpack.c.b16 %v323, %v322
    %v416 = vpack.c.b16 %v325, %v324
    %v417 = vpack.c.b16 %v327, %v326
    %v418 = vpack.c.b16 %v329, %v328
    %v419 = vpack.c.b16 %v331, %v330
    %v420 = vpack.c.b16 %v333, %v332
    %v421 = vpack.c.b16 %v335, %v334
    %v422 = vpack.c.b16 %v337, %v336
    %v423 = vpack.c.b16 %v339, %v338
    %v424 = vpack.c.b16 %v341, %v340
    %v425 = vpack.c.b16 %v343, %v342
    %v426 = vpack.c.b16 %v345, %v344
    %v427 = vpack.c.b16 %v347, %v346
    %v428 = vpack.c.b16 %v349, %v348
    %v429 = vpack.c.b16 %v351, %v350
    %v430 = vpack.c.b16 %v353, %v352
    %v431 = vpack.c.b16 %v355, %v354
    %v432 = vpack.c.b16 %v357, %v356
    %v433 = vpack.c.b16 %v359, %v358
    %v434 = vpack.c.b16 %v361, %v360
    %v435 = vpack.c.b16 %v363, %v362
    %v436 = vpack.c.b16 %v365, %v364
    %v437 = vpack.c.b16 %v367, %v366
    %v438 = vpack.c.b16 %v369, %v368
    %v439 = vpack.c.b16 %v371, %v370
    %v440 = vpack.c.b16 %v373, %v372
    %v441 = vpack.c.b16 %v375, %v374
    %v442 = vpack.c.b16 %v377, %v376
    %v443 = vpack.c.b16 %v379, %v378
    %v444 = vpack.c.b16 %v381, %v380
    %v445 = vpack.c.b16 %v383, %v382
    %v446 = vpack.c.b16 %v385, %v384
    %v447 = vpack.c.b16 %v387, %v386
    %v448 = vpack.c.b16 %v389, %v388
    %v449 = vpack.c.b16 %v391, %v390
    %v450 = vpack.c.b16 %v393, %v392
    %v451 = vpack.c.b16 %v395, %v394
    %v452 = vpack.c.b16 %v397, %v396
    %v453 = vpack.c.b16 %v399, %v398
    %v468 = vunpack.c.l.b16 %v163
    %v469 = vunpack.c.l.b16 %v164
    %v470 = vunpack.c.l.b16 %v165
    %v471 = vunpack.c.l.b16 %v166
    %v472 = vunpack.c.l.b16 %v167
    %v473 = vunpack.c.l.b16 %v168
    %v474 = vunpack.c.l.b16 %v169
    %v475 = vunpack.c.l.b16 %v170
    %v476 = vunpack.c.l.b16 %v171
    %v477 = vunpack.c.l.b16 %v172
    %v478 = vunpack.c.l.b16 %v173
    %v479 = vunpack.c.l.b16 %v174
    %v480 = vunpack.c.l.b16 %v175
    %v481 = vunpack.c.l.b16 %v176
    %v482 = vpack.c.b16 %v469, %v468
    %v483 = vpack.c.b16 %v471, %v470
    %v484 = vpack.c.b16 %v473, %v472
    %v485 = vpack.c.b16 %v475, %v474
    %v486 = vpack.c.b16 %v477, %v476
    %v487 = vpack.c.b16 %v479, %v478
    %v488 = vpack.c.b16 %v481, %v480
    %vm495 = vcmask 883712
    %v497 = vsel %vm495, %v400, 0
    %v500 = vsel %vm495, %v401, 0
    %v503 = vsel %vm495, %v402, 0
    %v506 = vsel %vm495, %v403, 0
    %v509 = vsel %vm495, %v404, 0
    %v512 = vsel %vm495, %v405, 0
    %v515 = vsel %vm495, %v406, 0
    %v518 = vsel %vm495, %v407, 0
    %v521 = vsel %vm495, %v408, 0
    %v524 = vsel %vm495, %v409, 0
    %v527 = vsel %vm495, %v410, 0
    %v530 = vsel %vm495, %v411, 0
    %v533 = vsel %vm495, %v412, 0
    %v536 = vsel %vm495, %v413, 0
    %v539 = vsel %vm495, %v414, 0
    %v542 = vsel %vm495, %v415, 0
    %v545 = vsel %vm495, %v416, 0
    %v548 = vsel %vm495, %v417, 0
    %v551 = vsel %vm495, %v418, 0
    %v554 = vsel %vm495, %v419, 0
    %v557 = vsel %vm495, %v420, 0
    %v560 = vsel %vm495, %v421, 0
    %v563 = vsel %vm495, %v422, 0
    %v566 = vsel %vm495, %v423, 0
    %v569 = vsel %vm495, %v424, 0
    %v572 = vsel %vm495, %v425, 0
    %v575 = vsel %vm495, %v426, 0
    %v578 = vsel %vm495, %v427, 0
    %v581 = vsel %vm495, %v428, 0
    %v584 = vsel %vm495, %v429, 0
    %v587 = vsel %vm495, %v430, 0
    %v590 = vsel %vm495, %v431, 0
    %v593 = vsel %vm495, %v432, 0
    %v596 = vsel %vm495, %v433, 0
    %v599 = vsel %vm495, %v434, 0
    %v602 = vsel %vm495, %v435, 0
    %v605 = vsel %vm495, %v436, 0
    %v608 = vsel %vm495, %v437, 0
    %v611 = vsel %vm495, %v438, 0
    %v614 = vsel %vm495, %v439, 0
    %v617 = vsel %vm495, %v440, 0
    %v620 = vsel %vm495, %v441, 0
    %v623 = vsel %vm495, %v442, 0
    %v626 = vsel %vm495, %v443, 0
    %v629 = vsel %vm495, %v444, 0
    %v632 = vsel %vm495, %v445, 0
    %v635 = vsel %vm495, %v446, 0
    %v638 = vsel %vm495, %v447, 0
    %v641 = vsel %vm495, %v448, 0
    %v644 = vsel %vm495, %v449, 0
    %v647 = vsel %vm495, %v450, 0
    %v650 = vsel %vm495, %v451, 0
    %v653 = vsel %vm495, %v452, 0
    %v656 = vsel %vm495, %v453, 0
    %vm658 = vcmask 1045504
    %v660 = vsel %vm658, %v488, 0
    %662 = vmatprep.subr.bf16.mxu0 0
    %663 = vmatpush1.bf16.msra.mxu0 0
    %664 = vmatprep.subr.bf16.mxu0 0
    %665 = vmatpush1.bf16.msra.mxu0 %v660
    %666 = vmatprep.subr.bf16.mxu0 0
    %667 = vmatpush1.bf16.msra.mxu0 %v487
    %668 = vmatprep.subr.bf16.mxu0 0
    %669 = vmatpush1.bf16.msra.mxu0 %v486
    %670 = vmatprep.subr.bf16.mxu0 0
    %671 = vmatpush1.bf16.msra.mxu0 %v485
    %672 = vmatprep.subr.bf16.mxu0 0
    %673 = vmatpush1.bf16.msra.mxu0 %v484
    %674 = vmatprep.subr.bf16.mxu0 0
    %675 = vmatpush1.bf16.msra.mxu0 %v483
    %676 = vmatprep.subr.bf16.mxu0 0
    %677 = vmatpush1.bf16.msra.mxu0 %v482
    %678 = vmatprep.subr.bf16.mxu0 0
    %679 = vmatpush2.bf16.msra.mxu0 0
    %680 = vmatprep.subr.bf16.mxu0 0
    %681 = vmatpush2.bf16.msra.mxu0 0
    %682 = vmatprep.subr.bf16.mxu0 0
    %683 = vmatpush2.bf16.msra.mxu0 0
    %684 = vmatprep.subr.bf16.mxu0 0
    %685 = vmatpush2.bf16.msra.mxu0 0
    %686 = vmatprep.subr.bf16.mxu0 0
    %687 = vmatpush2.bf16.msra.mxu0 0
    %688 = vmatprep.subr.bf16.mxu0 0
    %689 = vmatpush2.bf16.msra.mxu0 0
    %690 = vmatprep.subr.bf16.mxu0 0
    %691 = vmatpush2.bf16.msra.mxu0 0
    %692 = vmatprep.subr.bf16.mxu0 0
    %693 = vmatpush2.bf16.msra.mxu0 0
    %694 = vmatprep.mubr.bf16.mxu0 0
    %695 = vmatmul.mubr.bf16.gmra.mxu0 %v497
    %v696 = vpop.f32.mrf.mxu0
    %v697 = vadd.f32 %v182, %v696
    %v698 = vpop.f32.mrf.mxu0
    %v699 = vpop.f32.mrf.mxu0
    %v700 = vadd.f32 %v182, %v699
    %v701 = vpop.f32.mrf.mxu0
    %702 = vmatprep.mubr.bf16.mxu0 0
    %703 = vmatmul.mubr.bf16.gmra.mxu0 %v500
    %v704 = vpop.f32.mrf.mxu0
    %v705 = vadd.f32 %v182, %v704
    %v706 = vpop.f32.mrf.mxu0
    %v707 = vpop.f32.mrf.mxu0
    %v708 = vadd.f32 %v182, %v707
    %v709 = vpop.f32.mrf.mxu0
    %710 = vmatprep.mubr.bf16.mxu0 0
    %711 = vmatmul.mubr.bf16.gmra.mxu0 %v503
    %v712 = vpop.f32.mrf.mxu0
    %v713 = vadd.f32 %v182, %v712
    %v714 = vpop.f32.mrf.mxu0
    %v715 = vpop.f32.mrf.mxu0
    %v716 = vadd.f32 %v182, %v715
    %v717 = vpop.f32.mrf.mxu0
    %718 = vmatprep.mubr.bf16.mxu0 0
    %719 = vmatmul.mubr.bf16.gmra.mxu0 %v506
    %v720 = vpop.f32.mrf.mxu0
    %v721 = vadd.f32 %v182, %v720
    %v722 = vpop.f32.mrf.mxu0
    %v723 = vpop.f32.mrf.mxu0
    %v724 = vadd.f32 %v182, %v723
    %v725 = vpop.f32.mrf.mxu0
    %726 = vmatprep.mubr.bf16.mxu0 0
    %727 = vmatmul.mubr.bf16.gmra.mxu0 %v509
    %v728 = vpop.f32.mrf.mxu0
    %v729 = vadd.f32 %v182, %v728
    %v730 = vpop.f32.mrf.mxu0
    %v731 = vpop.f32.mrf.mxu0
    %v732 = vadd.f32 %v182, %v731
    %v733 = vpop.f32.mrf.mxu0
    %734 = vmatprep.mubr.bf16.mxu0 0
    %735 = vmatmul.mubr.bf16.gmra.mxu0 %v512
    %v736 = vpop.f32.mrf.mxu0
    %v737 = vadd.f32 %v182, %v736
    %v738 = vpop.f32.mrf.mxu0
    %v739 = vpop.f32.mrf.mxu0
    %v740 = vadd.f32 %v182, %v739
    %v741 = vpop.f32.mrf.mxu0
    %742 = vmatprep.mubr.bf16.mxu0 0
    %743 = vmatmul.mubr.bf16.gmra.mxu0 %v515
    %v744 = vpop.f32.mrf.mxu0
    %v745 = vadd.f32 %v182, %v744
    %v746 = vpop.f32.mrf.mxu0
    %v747 = vpop.f32.mrf.mxu0
    %v748 = vadd.f32 %v182, %v747
    %v749 = vpop.f32.mrf.mxu0
    %750 = vmatprep.mubr.bf16.mxu0 0
    %751 = vmatmul.mubr.bf16.gmra.mxu0 %v518
    %v752 = vpop.f32.mrf.mxu0
    %v753 = vadd.f32 %v182, %v752
    %v754 = vpop.f32.mrf.mxu0
    %v755 = vpop.f32.mrf.mxu0
    %v756 = vadd.f32 %v182, %v755
    %v757 = vpop.f32.mrf.mxu0
    %758 = vmatprep.mubr.bf16.mxu0 0
    %759 = vmatmul.mubr.bf16.gmra.mxu0 %v521
    %v760 = vpop.f32.mrf.mxu0
    %v761 = vadd.f32 %v182, %v760
    %v762 = vpop.f32.mrf.mxu0
    %v763 = vpop.f32.mrf.mxu0
    %v764 = vadd.f32 %v182, %v763
    %v765 = vpop.f32.mrf.mxu0
    %766 = vmatprep.mubr.bf16.mxu0 0
    %767 = vmatmul.mubr.bf16.gmra.mxu0 %v524
    %v768 = vpop.f32.mrf.mxu0
    %v769 = vadd.f32 %v182, %v768
    %v770 = vpop.f32.mrf.mxu0
    %v771 = vpop.f32.mrf.mxu0
    %v772 = vadd.f32 %v182, %v771
    %v773 = vpop.f32.mrf.mxu0
    %774 = vmatprep.mubr.bf16.mxu0 0
    %775 = vmatmul.mubr.bf16.gmra.mxu0 %v527
    %v776 = vpop.f32.mrf.mxu0
    %v777 = vadd.f32 %v182, %v776
    %v778 = vpop.f32.mrf.mxu0
    %v779 = vpop.f32.mrf.mxu0
    %v780 = vadd.f32 %v182, %v779
    %v781 = vpop.f32.mrf.mxu0
    %782 = vmatprep.mubr.bf16.mxu0 0
    %783 = vmatmul.mubr.bf16.gmra.mxu0 %v530
    %v784 = vpop.f32.mrf.mxu0
    %v785 = vadd.f32 %v182, %v784
    %v786 = vpop.f32.mrf.mxu0
    %v787 = vpop.f32.mrf.mxu0
    %v788 = vadd.f32 %v182, %v787
    %v789 = vpop.f32.mrf.mxu0
    %790 = vmatprep.mubr.bf16.mxu0 0
    %791 = vmatmul.mubr.bf16.gmra.mxu0 %v533
    %v792 = vpop.f32.mrf.mxu0
    %v793 = vadd.f32 %v182, %v792
    %v794 = vpop.f32.mrf.mxu0
    %v795 = vpop.f32.mrf.mxu0
    %v796 = vadd.f32 %v182, %v795
    %v797 = vpop.f32.mrf.mxu0
    %798 = vmatprep.mubr.bf16.mxu0 0
    %799 = vmatmul.mubr.bf16.gmra.mxu0 %v536
    %v800 = vpop.f32.mrf.mxu0
    %v801 = vadd.f32 %v182, %v800
    %v802 = vpop.f32.mrf.mxu0
    %v803 = vpop.f32.mrf.mxu0
    %v804 = vadd.f32 %v182, %v803
    %v805 = vpop.f32.mrf.mxu0
    %806 = vmatprep.mubr.bf16.mxu0 0
    %807 = vmatmul.mubr.bf16.gmra.mxu0 %v539
    %v808 = vpop.f32.mrf.mxu0
    %v809 = vadd.f32 %v182, %v808
    %v810 = vpop.f32.mrf.mxu0
    %v811 = vpop.f32.mrf.mxu0
    %v812 = vadd.f32 %v182, %v811
    %v813 = vpop.f32.mrf.mxu0
    %814 = vmatprep.mubr.bf16.mxu0 0
    %815 = vmatmul.mubr.bf16.gmra.mxu0 %v542
    %v816 = vpop.f32.mrf.mxu0
    %v817 = vadd.f32 %v182, %v816
    %v818 = vpop.f32.mrf.mxu0
    %v819 = vpop.f32.mrf.mxu0
    %v820 = vadd.f32 %v182, %v819
    %v821 = vpop.f32.mrf.mxu0
    %822 = vmatprep.mubr.bf16.mxu0 0
    %823 = vmatmul.mubr.bf16.gmra.mxu0 %v545
    %v824 = vpop.f32.mrf.mxu0
    %v825 = vadd.f32 %v182, %v824
    %v826 = vpop.f32.mrf.mxu0
    %v827 = vpop.f32.mrf.mxu0
    %v828 = vadd.f32 %v182, %v827
    %v829 = vpop.f32.mrf.mxu0
    %830 = vmatprep.mubr.bf16.mxu0 0
    %831 = vmatmul.mubr.bf16.gmra.mxu0 %v548
    %v832 = vpop.f32.mrf.mxu0
    %v833 = vadd.f32 %v182, %v832
    %v834 = vpop.f32.mrf.mxu0
    %v835 = vpop.f32.mrf.mxu0
    %v836 = vadd.f32 %v182, %v835
    %v837 = vpop.f32.mrf.mxu0
    %838 = vmatprep.mubr.bf16.mxu0 0
    %839 = vmatmul.mubr.bf16.gmra.mxu0 %v551
    %v840 = vpop.f32.mrf.mxu0
    %v841 = vadd.f32 %v182, %v840
    %v842 = vpop.f32.mrf.mxu0
    %v843 = vpop.f32.mrf.mxu0
    %v844 = vadd.f32 %v182, %v843
    %v845 = vpop.f32.mrf.mxu0
    %846 = vmatprep.mubr.bf16.mxu0 0
    %847 = vmatmul.mubr.bf16.gmra.mxu0 %v554
    %v848 = vpop.f32.mrf.mxu0
    %v849 = vadd.f32 %v182, %v848
    %v850 = vpop.f32.mrf.mxu0
    %v851 = vpop.f32.mrf.mxu0
    %v852 = vadd.f32 %v182, %v851
    %v853 = vpop.f32.mrf.mxu0
    %854 = vmatprep.mubr.bf16.mxu0 0
    %855 = vmatmul.mubr.bf16.gmra.mxu0 %v557
    %v856 = vpop.f32.mrf.mxu0
    %v857 = vadd.f32 %v182, %v856
    %v858 = vpop.f32.mrf.mxu0
    %v859 = vpop.f32.mrf.mxu0
    %v860 = vadd.f32 %v182, %v859
    %v861 = vpop.f32.mrf.mxu0
    %862 = vmatprep.mubr.bf16.mxu0 0
    %863 = vmatmul.mubr.bf16.gmra.mxu0 %v560
    %v864 = vpop.f32.mrf.mxu0
    %v865 = vadd.f32 %v182, %v864
    %v866 = vpop.f32.mrf.mxu0
    %v867 = vpop.f32.mrf.mxu0
    %v868 = vadd.f32 %v182, %v867
    %v869 = vpop.f32.mrf.mxu0
    %870 = vmatprep.mubr.bf16.mxu0 0
    %871 = vmatmul.mubr.bf16.gmra.mxu0 %v563
    %v872 = vpop.f32.mrf.mxu0
    %v873 = vadd.f32 %v182, %v872
    %v874 = vpop.f32.mrf.mxu0
    %v875 = vpop.f32.mrf.mxu0
    %v876 = vadd.f32 %v182, %v875
    %v877 = vpop.f32.mrf.mxu0
    %878 = vmatprep.mubr.bf16.mxu0 0
    %879 = vmatmul.mubr.bf16.gmra.mxu0 %v566
    %v880 = vpop.f32.mrf.mxu0
    %v881 = vadd.f32 %v182, %v880
    %v882 = vpop.f32.mrf.mxu0
    %v883 = vpop.f32.mrf.mxu0
    %v884 = vadd.f32 %v182, %v883
    %v885 = vpop.f32.mrf.mxu0
    %886 = vmatprep.mubr.bf16.mxu0 0
    %887 = vmatmul.mubr.bf16.gmra.mxu0 %v569
    %v888 = vpop.f32.mrf.mxu0
    %v889 = vadd.f32 %v182, %v888
    %v890 = vpop.f32.mrf.mxu0
    %v891 = vpop.f32.mrf.mxu0
    %v892 = vadd.f32 %v182, %v891
    %v893 = vpop.f32.mrf.mxu0
    %894 = vmatprep.mubr.bf16.mxu0 0
    %895 = vmatmul.mubr.bf16.gmra.mxu0 %v572
    %v896 = vpop.f32.mrf.mxu0
    %v897 = vadd.f32 %v182, %v896
    %v898 = vpop.f32.mrf.mxu0
    %v899 = vpop.f32.mrf.mxu0
    %v900 = vadd.f32 %v182, %v899
    %v901 = vpop.f32.mrf.mxu0
    %902 = vmatprep.mubr.bf16.mxu0 0
    %903 = vmatmul.mubr.bf16.gmra.mxu0 %v575
    %v904 = vpop.f32.mrf.mxu0
    %v905 = vadd.f32 %v182, %v904
    %v906 = vpop.f32.mrf.mxu0
    %v907 = vpop.f32.mrf.mxu0
    %v908 = vadd.f32 %v182, %v907
    %v909 = vpop.f32.mrf.mxu0
    %910 = vmatprep.mubr.bf16.mxu0 0
    %911 = vmatmul.mubr.bf16.gmra.mxu0 %v578
    %v912 = vpop.f32.mrf.mxu0
    %v913 = vadd.f32 %v182, %v912
    %v914 = vpop.f32.mrf.mxu0
    %v915 = vpop.f32.mrf.mxu0
    %v916 = vadd.f32 %v182, %v915
    %v917 = vpop.f32.mrf.mxu0
    %918 = vmatprep.mubr.bf16.mxu0 0
    %919 = vmatmul.mubr.bf16.gmra.mxu0 %v581
    %v920 = vpop.f32.mrf.mxu0
    %v921 = vadd.f32 %v182, %v920
    %v922 = vpop.f32.mrf.mxu0
    %v923 = vpop.f32.mrf.mxu0
    %v924 = vadd.f32 %v182, %v923
    %v925 = vpop.f32.mrf.mxu0
    %926 = vmatprep.mubr.bf16.mxu0 0
    %927 = vmatmul.mubr.bf16.gmra.mxu0 %v584
    %v928 = vpop.f32.mrf.mxu0
    %v929 = vadd.f32 %v182, %v928
    %v930 = vpop.f32.mrf.mxu0
    %v931 = vpop.f32.mrf.mxu0
    %v932 = vadd.f32 %v182, %v931
    %v933 = vpop.f32.mrf.mxu0
    %934 = vmatprep.mubr.bf16.mxu0 0
    %935 = vmatmul.mubr.bf16.gmra.mxu0 %v587
    %v936 = vpop.f32.mrf.mxu0
    %v937 = vadd.f32 %v182, %v936
    %v938 = vpop.f32.mrf.mxu0
    %v939 = vpop.f32.mrf.mxu0
    %v940 = vadd.f32 %v182, %v939
    %v941 = vpop.f32.mrf.mxu0
    %942 = vmatprep.mubr.bf16.mxu0 0
    %943 = vmatmul.mubr.bf16.gmra.mxu0 %v590
    %v944 = vpop.f32.mrf.mxu0
    %v945 = vadd.f32 %v182, %v944
    %v946 = vpop.f32.mrf.mxu0
    %v947 = vpop.f32.mrf.mxu0
    %v948 = vadd.f32 %v182, %v947
    %v949 = vpop.f32.mrf.mxu0
    %950 = vmatprep.mubr.bf16.mxu0 0
    %951 = vmatmul.mubr.bf16.gmra.mxu0 %v593
    %v952 = vpop.f32.mrf.mxu0
    %v953 = vadd.f32 %v182, %v952
    %v954 = vpop.f32.mrf.mxu0
    %v955 = vpop.f32.mrf.mxu0
    %v956 = vadd.f32 %v182, %v955
    %v957 = vpop.f32.mrf.mxu0
    %958 = vmatprep.mubr.bf16.mxu0 0
    %959 = vmatmul.mubr.bf16.gmra.mxu0 %v596
    %v960 = vpop.f32.mrf.mxu0
    %v961 = vadd.f32 %v182, %v960
    %v962 = vpop.f32.mrf.mxu0
    %v963 = vpop.f32.mrf.mxu0
    %v964 = vadd.f32 %v182, %v963
    %v965 = vpop.f32.mrf.mxu0
    %966 = vmatprep.mubr.bf16.mxu0 0
    %967 = vmatmul.mubr.bf16.gmra.mxu0 %v599
    %v968 = vpop.f32.mrf.mxu0
    %v969 = vadd.f32 %v182, %v968
    %v970 = vpop.f32.mrf.mxu0
    %v971 = vpop.f32.mrf.mxu0
    %v972 = vadd.f32 %v182, %v971
    %v973 = vpop.f32.mrf.mxu0
    %974 = vmatprep.mubr.bf16.mxu0 0
    %975 = vmatmul.mubr.bf16.gmra.mxu0 %v602
    %v976 = vpop.f32.mrf.mxu0
    %v977 = vadd.f32 %v182, %v976
    %v978 = vpop.f32.mrf.mxu0
    %v979 = vpop.f32.mrf.mxu0
    %v980 = vadd.f32 %v182, %v979
    %v981 = vpop.f32.mrf.mxu0
    %982 = vmatprep.mubr.bf16.mxu0 0
    %983 = vmatmul.mubr.bf16.gmra.mxu0 %v605
    %v984 = vpop.f32.mrf.mxu0
    %v985 = vadd.f32 %v182, %v984
    %v986 = vpop.f32.mrf.mxu0
    %v987 = vpop.f32.mrf.mxu0
    %v988 = vadd.f32 %v182, %v987
    %v989 = vpop.f32.mrf.mxu0
    %990 = vmatprep.mubr.bf16.mxu0 0
    %991 = vmatmul.mubr.bf16.gmra.mxu0 %v608
    %v992 = vpop.f32.mrf.mxu0
    %v993 = vadd.f32 %v182, %v992
    %v994 = vpop.f32.mrf.mxu0
    %v995 = vpop.f32.mrf.mxu0
    %v996 = vadd.f32 %v182, %v995
    %v997 = vpop.f32.mrf.mxu0
    %998 = vmatprep.mubr.bf16.mxu0 0
    %999 = vmatmul.mubr.bf16.gmra.mxu0 %v611
    %v1000 = vpop.f32.mrf.mxu0
    %v1001 = vadd.f32 %v182, %v1000
    %v1002 = vpop.f32.mrf.mxu0
    %v1003 = vpop.f32.mrf.mxu0
    %v1004 = vadd.f32 %v182, %v1003
    %v1005 = vpop.f32.mrf.mxu0
    %1006 = vmatprep.mubr.bf16.mxu0 0
    %1007 = vmatmul.mubr.bf16.gmra.mxu0 %v614
    %v1008 = vpop.f32.mrf.mxu0
    %v1009 = vadd.f32 %v182, %v1008
    %v1010 = vpop.f32.mrf.mxu0
    %v1011 = vpop.f32.mrf.mxu0
    %v1012 = vadd.f32 %v182, %v1011
    %v1013 = vpop.f32.mrf.mxu0
    %1014 = vmatprep.mubr.bf16.mxu0 0
    %1015 = vmatmul.mubr.bf16.gmra.mxu0 %v617
    %v1016 = vpop.f32.mrf.mxu0
    %v1017 = vadd.f32 %v182, %v1016
    %v1018 = vpop.f32.mrf.mxu0
    %v1019 = vpop.f32.mrf.mxu0
    %v1020 = vadd.f32 %v182, %v1019
    %v1021 = vpop.f32.mrf.mxu0
    %1022 = vmatprep.mubr.bf16.mxu0 0
    %1023 = vmatmul.mubr.bf16.gmra.mxu0 %v620
    %v1024 = vpop.f32.mrf.mxu0
    %v1025 = vadd.f32 %v182, %v1024
    %v1026 = vpop.f32.mrf.mxu0
    %v1027 = vpop.f32.mrf.mxu0
    %v1028 = vadd.f32 %v182, %v1027
    %v1029 = vpop.f32.mrf.mxu0
    %1030 = vmatprep.mubr.bf16.mxu0 0
    %1031 = vmatmul.mubr.bf16.gmra.mxu0 %v623
    %v1032 = vpop.f32.mrf.mxu0
    %v1033 = vadd.f32 %v182, %v1032
    %v1034 = vpop.f32.mrf.mxu0
    %v1035 = vpop.f32.mrf.mxu0
    %v1036 = vadd.f32 %v182, %v1035
    %v1037 = vpop.f32.mrf.mxu0
    %1038 = vmatprep.mubr.bf16.mxu0 0
    %1039 = vmatmul.mubr.bf16.gmra.mxu0 %v626
    %v1040 = vpop.f32.mrf.mxu0
    %v1041 = vadd.f32 %v182, %v1040
    %v1042 = vpop.f32.mrf.mxu0
    %v1043 = vpop.f32.mrf.mxu0
    %v1044 = vadd.f32 %v182, %v1043
    %v1045 = vpop.f32.mrf.mxu0
    %1046 = vmatprep.mubr.bf16.mxu0 0
    %1047 = vmatmul.mubr.bf16.gmra.mxu0 %v629
    %v1048 = vpop.f32.mrf.mxu0
    %v1049 = vadd.f32 %v182, %v1048
    %v1050 = vpop.f32.mrf.mxu0
    %v1051 = vpop.f32.mrf.mxu0
    %v1052 = vadd.f32 %v182, %v1051
    %v1053 = vpop.f32.mrf.mxu0
    %1054 = vmatprep.mubr.bf16.mxu0 0
    %1055 = vmatmul.mubr.bf16.gmra.mxu0 %v632
    %v1056 = vpop.f32.mrf.mxu0
    %v1057 = vadd.f32 %v182, %v1056
    %v1058 = vpop.f32.mrf.mxu0
    %v1059 = vpop.f32.mrf.mxu0
    %v1060 = vadd.f32 %v182, %v1059
    %v1061 = vpop.f32.mrf.mxu0
    %1062 = vmatprep.mubr.bf16.mxu0 0
    %1063 = vmatmul.mubr.bf16.gmra.mxu0 %v635
    %v1064 = vpop.f32.mrf.mxu0
    %v1065 = vadd.f32 %v182, %v1064
    %v1066 = vpop.f32.mrf.mxu0
    %v1067 = vpop.f32.mrf.mxu0
    %v1068 = vadd.f32 %v182, %v1067
    %v1069 = vpop.f32.mrf.mxu0
    %1070 = vmatprep.mubr.bf16.mxu0 0
    %1071 = vmatmul.mubr.bf16.gmra.mxu0 %v638
    %v1072 = vpop.f32.mrf.mxu0
    %v1073 = vadd.f32 %v182, %v1072
    %v1074 = vpop.f32.mrf.mxu0
    %v1075 = vpop.f32.mrf.mxu0
    %v1076 = vadd.f32 %v182, %v1075
    %v1077 = vpop.f32.mrf.mxu0
    %1078 = vmatprep.mubr.bf16.mxu0 0
    %1079 = vmatmul.mubr.bf16.gmra.mxu0 %v641
    %v1080 = vpop.f32.mrf.mxu0
    %v1081 = vadd.f32 %v182, %v1080
    %v1082 = vpop.f32.mrf.mxu0
    %v1083 = vpop.f32.mrf.mxu0
    %v1084 = vadd.f32 %v182, %v1083
    %v1085 = vpop.f32.mrf.mxu0
    %1086 = vmatprep.mubr.bf16.mxu0 0
    %1087 = vmatmul.mubr.bf16.gmra.mxu0 %v644
    %v1088 = vpop.f32.mrf.mxu0
    %v1089 = vadd.f32 %v182, %v1088
    %v1090 = vpop.f32.mrf.mxu0
    %v1091 = vpop.f32.mrf.mxu0
    %v1092 = vadd.f32 %v182, %v1091
    %v1093 = vpop.f32.mrf.mxu0
    %1094 = vmatprep.mubr.bf16.mxu0 0
    %1095 = vmatmul.mubr.bf16.gmra.mxu0 %v647
    %v1096 = vpop.f32.mrf.mxu0
    %v1097 = vadd.f32 %v182, %v1096
    %v1098 = vpop.f32.mrf.mxu0
    %v1099 = vpop.f32.mrf.mxu0
    %v1100 = vadd.f32 %v182, %v1099
    %v1101 = vpop.f32.mrf.mxu0
    %1102 = vmatprep.mubr.bf16.mxu0 0
    %1103 = vmatmul.mubr.bf16.gmra.mxu0 %v650
    %v1104 = vpop.f32.mrf.mxu0
    %v1105 = vadd.f32 %v182, %v1104
    %v1106 = vpop.f32.mrf.mxu0
    %v1107 = vpop.f32.mrf.mxu0
    %v1108 = vadd.f32 %v182, %v1107
    %v1109 = vpop.f32.mrf.mxu0
    %1110 = vmatprep.mubr.bf16.mxu0 0
    %1111 = vmatmul.mubr.bf16.gmra.mxu0 %v653
    %v1112 = vpop.f32.mrf.mxu0
    %v1113 = vadd.f32 %v182, %v1112
    %v1114 = vpop.f32.mrf.mxu0
    %v1115 = vpop.f32.mrf.mxu0
    %v1116 = vadd.f32 %v182, %v1115
    %v1117 = vpop.f32.mrf.mxu0
    %1118 = vmatprep.mubr.bf16.mxu0 0
    %1119 = vmatmul.mubr.bf16.gmra.mxu0 %v656
    %v1120 = vpop.f32.mrf.mxu0
    %v1121 = vadd.f32 %v182, %v1120
    %v1122 = vpop.f32.mrf.mxu0
    %v1123 = vpop.f32.mrf.mxu0
    %v1124 = vadd.f32 %v182, %v1123
    %v1125 = vpop.f32.mrf.mxu0
    %1126 = vdwg.mxu0
    %v1127 = vmax.f32 %v697, 0.0
    %v1128 = vmax.f32 %v700, 0.0
    %v1129 = vmax.f32 %v705, 0.0
    %v1130 = vmax.f32 %v708, 0.0
    %v1131 = vmax.f32 %v713, 0.0
    %v1132 = vmax.f32 %v716, 0.0
    %v1133 = vmax.f32 %v721, 0.0
    %v1134 = vmax.f32 %v724, 0.0
    %v1135 = vmax.f32 %v729, 0.0
    %v1136 = vmax.f32 %v732, 0.0
    %v1137 = vmax.f32 %v737, 0.0
    %v1138 = vmax.f32 %v740, 0.0
    %v1139 = vmax.f32 %v745, 0.0
    %v1140 = vmax.f32 %v748, 0.0
    %v1141 = vmax.f32 %v753, 0.0
    %v1142 = vmax.f32 %v756, 0.0
    %v1143 = vmax.f32 %v761, 0.0
    %v1144 = vmax.f32 %v764, 0.0
    %v1145 = vmax.f32 %v769, 0.0
    %v1146 = vmax.f32 %v772, 0.0
    %v1147 = vmax.f32 %v777, 0.0
    %v1148 = vmax.f32 %v780, 0.0
    %v1149 = vmax.f32 %v785, 0.0
    %v1150 = vmax.f32 %v788, 0.0
    %v1151 = vmax.f32 %v793, 0.0
    %v1152 = vmax.f32 %v796, 0.0
    %v1153 = vmax.f32 %v801, 0.0
    %v1154 = vmax.f32 %v804, 0.0
    %v1155 = vmax.f32 %v809, 0.0
    %v1156 = vmax.f32 %v812, 0.0
    %v1157 = vmax.f32 %v817, 0.0
    %v1158 = vmax.f32 %v820, 0.0
    %v1159 = vmax.f32 %v825, 0.0
    %v1160 = vmax.f32 %v828, 0.0
    %v1161 = vmax.f32 %v833, 0.0
    %v1162 = vmax.f32 %v836, 0.0
    %v1163 = vmax.f32 %v841, 0.0
    %v1164 = vmax.f32 %v844, 0.0
    %v1165 = vmax.f32 %v849, 0.0
    %v1166 = vmax.f32 %v852, 0.0
    %v1167 = vmax.f32 %v857, 0.0
    %v1168 = vmax.f32 %v860, 0.0
    %v1169 = vmax.f32 %v865, 0.0
    %v1170 = vmax.f32 %v868, 0.0
    %v1171 = vmax.f32 %v873, 0.0
    %v1172 = vmax.f32 %v876, 0.0
    %v1173 = vmax.f32 %v881, 0.0
    %v1174 = vmax.f32 %v884, 0.0
    %v1175 = vmax.f32 %v889, 0.0
    %v1176 = vmax.f32 %v892, 0.0
    %v1177 = vmax.f32 %v897, 0.0
    %v1178 = vmax.f32 %v900, 0.0
    %v1179 = vmax.f32 %v905, 0.0
    %v1180 = vmax.f32 %v908, 0.0
    %v1181 = vmax.f32 %v913, 0.0
    %v1182 = vmax.f32 %v916, 0.0
    %v1183 = vmax.f32 %v921, 0.0
    %v1184 = vmax.f32 %v924, 0.0
    %v1185 = vmax.f32 %v929, 0.0
    %v1186 = vmax.f32 %v932, 0.0
    %v1187 = vmax.f32 %v937, 0.0
    %v1188 = vmax.f32 %v940, 0.0
    %v1189 = vmax.f32 %v945, 0.0
    %v1190 = vmax.f32 %v948, 0.0
    %v1191 = vmax.f32 %v953, 0.0
    %v1192 = vmax.f32 %v956, 0.0
    %v1193 = vmax.f32 %v961, 0.0
    %v1194 = vmax.f32 %v964, 0.0
    %v1195 = vmax.f32 %v969, 0.0
    %v1196 = vmax.f32 %v972, 0.0
    %v1197 = vmax.f32 %v977, 0.0
    %v1198 = vmax.f32 %v980, 0.0
    %v1199 = vmax.f32 %v985, 0.0
    %v1200 = vmax.f32 %v988, 0.0
    %v1201 = vmax.f32 %v993, 0.0
    %v1202 = vmax.f32 %v996, 0.0
    %v1203 = vmax.f32 %v1001, 0.0
    %v1204 = vmax.f32 %v1004, 0.0
    %v1205 = vmax.f32 %v1009, 0.0
    %v1206 = vmax.f32 %v1012, 0.0
    %v1207 = vmax.f32 %v1017, 0.0
    %v1208 = vmax.f32 %v1020, 0.0
    %v1209 = vmax.f32 %v1025, 0.0
    %v1210 = vmax.f32 %v1028, 0.0
    %v1211 = vmax.f32 %v1033, 0.0
    %v1212 = vmax.f32 %v1036, 0.0
    %v1213 = vmax.f32 %v1041, 0.0
    %v1214 = vmax.f32 %v1044, 0.0
    %v1215 = vmax.f32 %v1049, 0.0
    %v1216 = vmax.f32 %v1052, 0.0
    %v1217 = vmax.f32 %v1057, 0.0
    %v1218 = vmax.f32 %v1060, 0.0
    %v1219 = vmax.f32 %v1065, 0.0
    %v1220 = vmax.f32 %v1068, 0.0
    %v1221 = vmax.f32 %v1073, 0.0
    %v1222 = vmax.f32 %v1076, 0.0
    %v1223 = vmax.f32 %v1081, 0.0
    %v1224 = vmax.f32 %v1084, 0.0
    %v1225 = vmax.f32 %v1089, 0.0
    %v1226 = vmax.f32 %v1092, 0.0
    %v1227 = vmax.f32 %v1097, 0.0
    %v1228 = vmax.f32 %v1100, 0.0
    %v1229 = vmax.f32 %v1105, 0.0
    %v1230 = vmax.f32 %v1108, 0.0
    %v1231 = vmax.f32 %v1113, 0.0
    %v1232 = vmax.f32 %v1116, 0.0
    %v1233 = vmax.f32 %v1121, 0.0
    %v1234 = vmax.f32 %v1124, 0.0
    %vm1235 = vcmask 64512
    %1236 = vst.msk [vmem:[#allocation2] sm:$0xff] %vm1235, %v1127
    %1237 = vst.msk [vmem:[#allocation2 + $0x8] sm:$0xff] %vm1235, %v1128
    %1238 = vst.msk [vmem:[#allocation2 + $0x10] sm:$0xff] %vm1235, %v1129
    %1239 = vst.msk [vmem:[#allocation2 + $0x18] sm:$0xff] %vm1235, %v1130
    %1240 = vst.msk [vmem:[#allocation2 + $0x20] sm:$0xff] %vm1235, %v1131
    %1241 = vst.msk [vmem:[#allocation2 + $0x28] sm:$0xff] %vm1235, %v1132
    %1242 = vst.msk [vmem:[#allocation2 + $0x30] sm:$0xff] %vm1235, %v1133
    %1243 = vst.msk [vmem:[#allocation2 + $0x38] sm:$0xff] %vm1235, %v1134
    %1244 = vst.msk [vmem:[#allocation2 + $0x40] sm:$0xff] %vm1235, %v1135
    %1245 = vst.msk [vmem:[#allocation2 + $0x48] sm:$0xff] %vm1235, %v1136
    %1246 = vst.msk [vmem:[#allocation2 + $0x50] sm:$0xff] %vm1235, %v1137
    %1247 = vst.msk [vmem:[#allocation2 + $0x58] sm:$0xff] %vm1235, %v1138
    %1248 = vst.msk [vmem:[#allocation2 + $0x60] sm:$0xff] %vm1235, %v1139
    %1249 = vst.msk [vmem:[#allocation2 + $0x68] sm:$0xff] %vm1235, %v1140
    %1250 = vst.msk [vmem:[#allocation2 + $0x70] sm:$0xff] %vm1235, %v1141
    %1251 = vst.msk [vmem:[#allocation2 + $0x78] sm:$0xff] %vm1235, %v1142
    %1252 = vst.msk [vmem:[#allocation2 + $0x80] sm:$0xff] %vm1235, %v1143
    %1253 = vst.msk [vmem:[#allocation2 + $0x88] sm:$0xff] %vm1235, %v1144
    %1254 = vst.msk [vmem:[#allocation2 + $0x90] sm:$0xff] %vm1235, %v1145
    %1255 = vst.msk [vmem:[#allocation2 + $0x98] sm:$0xff] %vm1235, %v1146
    %1256 = vst.msk [vmem:[#allocation2 + $0xa0] sm:$0xff] %vm1235, %v1147
    %1257 = vst.msk [vmem:[#allocation2 + $0xa8] sm:$0xff] %vm1235, %v1148
    %1258 = vst.msk [vmem:[#allocation2 + $0xb0] sm:$0xff] %vm1235, %v1149
    %1259 = vst.msk [vmem:[#allocation2 + $0xb8] sm:$0xff] %vm1235, %v1150
    %1260 = vst.msk [vmem:[#allocation2 + $0xc0] sm:$0xff] %vm1235, %v1151
    %1261 = vst.msk [vmem:[#allocation2 + $0xc8] sm:$0xff] %vm1235, %v1152
    %1262 = vst.msk [vmem:[#allocation2 + $0xd0] sm:$0xff] %vm1235, %v1153
    %1263 = vst.msk [vmem:[#allocation2 + $0xd8] sm:$0xff] %vm1235, %v1154
    %1264 = vst.msk [vmem:[#allocation2 + $0xe0] sm:$0xff] %vm1235, %v1155
    %1265 = vst.msk [vmem:[#allocation2 + $0xe8] sm:$0xff] %vm1235, %v1156
    %1266 = vst.msk [vmem:[#allocation2 + $0xf0] sm:$0xff] %vm1235, %v1157
    %1267 = vst.msk [vmem:[#allocation2 + $0xf8] sm:$0xff] %vm1235, %v1158
    %1268 = vst.msk [vmem:[#allocation2 + $0x100] sm:$0xff] %vm1235, %v1159
    %1269 = vst.msk [vmem:[#allocation2 + $0x108] sm:$0xff] %vm1235, %v1160
    %1270 = vst.msk [vmem:[#allocation2 + $0x110] sm:$0xff] %vm1235, %v1161
    %1271 = vst.msk [vmem:[#allocation2 + $0x118] sm:$0xff] %vm1235, %v1162
    %1272 = vst.msk [vmem:[#allocation2 + $0x120] sm:$0xff] %vm1235, %v1163
    %1273 = vst.msk [vmem:[#allocation2 + $0x128] sm:$0xff] %vm1235, %v1164
    %1274 = vst.msk [vmem:[#allocation2 + $0x130] sm:$0xff] %vm1235, %v1165
    %1275 = vst.msk [vmem:[#allocation2 + $0x138] sm:$0xff] %vm1235, %v1166
    %1276 = vst.msk [vmem:[#allocation2 + $0x140] sm:$0xff] %vm1235, %v1167
    %1277 = vst.msk [vmem:[#allocation2 + $0x148] sm:$0xff] %vm1235, %v1168
    %1278 = vst.msk [vmem:[#allocation2 + $0x150] sm:$0xff] %vm1235, %v1169
    %1279 = vst.msk [vmem:[#allocation2 + $0x158] sm:$0xff] %vm1235, %v1170
    %1280 = vst.msk [vmem:[#allocation2 + $0x160] sm:$0xff] %vm1235, %v1171
    %1281 = vst.msk [vmem:[#allocation2 + $0x168] sm:$0xff] %vm1235, %v1172
    %1282 = vst.msk [vmem:[#allocation2 + $0x170] sm:$0xff] %vm1235, %v1173
    %1283 = vst.msk [vmem:[#allocation2 + $0x178] sm:$0xff] %vm1235, %v1174
    %1284 = vst.msk [vmem:[#allocation2 + $0x180] sm:$0xff] %vm1235, %v1175
    %1285 = vst.msk [vmem:[#allocation2 + $0x188] sm:$0xff] %vm1235, %v1176
    %1286 = vst.msk [vmem:[#allocation2 + $0x190] sm:$0xff] %vm1235, %v1177
    %1287 = vst.msk [vmem:[#allocation2 + $0x198] sm:$0xff] %vm1235, %v1178
    %1288 = vst.msk [vmem:[#allocation2 + $0x1a0] sm:$0xff] %vm1235, %v1179
    %1289 = vst.msk [vmem:[#allocation2 + $0x1a8] sm:$0xff] %vm1235, %v1180
    %1290 = vst.msk [vmem:[#allocation2 + $0x1b0] sm:$0xff] %vm1235, %v1181
    %1291 = vst.msk [vmem:[#allocation2 + $0x1b8] sm:$0xff] %vm1235, %v1182
    %1292 = vst.msk [vmem:[#allocation2 + $0x1c0] sm:$0xff] %vm1235, %v1183
    %1293 = vst.msk [vmem:[#allocation2 + $0x1c8] sm:$0xff] %vm1235, %v1184
    %1294 = vst.msk [vmem:[#allocation2 + $0x1d0] sm:$0xff] %vm1235, %v1185
    %1295 = vst.msk [vmem:[#allocation2 + $0x1d8] sm:$0xff] %vm1235, %v1186
    %1296 = vst.msk [vmem:[#allocation2 + $0x1e0] sm:$0xff] %vm1235, %v1187
    %1297 = vst.msk [vmem:[#allocation2 + $0x1e8] sm:$0xff] %vm1235, %v1188
    %1298 = vst.msk [vmem:[#allocation2 + $0x1f0] sm:$0xff] %vm1235, %v1189
    %1299 = vst.msk [vmem:[#allocation2 + $0x1f8] sm:$0xff] %vm1235, %v1190
    %1300 = vst.msk [vmem:[#allocation2 + $0x200] sm:$0xff] %vm1235, %v1191
    %1301 = vst.msk [vmem:[#allocation2 + $0x208] sm:$0xff] %vm1235, %v1192
    %1302 = vst.msk [vmem:[#allocation2 + $0x210] sm:$0xff] %vm1235, %v1193
    %1303 = vst.msk [vmem:[#allocation2 + $0x218] sm:$0xff] %vm1235, %v1194
    %1304 = vst.msk [vmem:[#allocation2 + $0x220] sm:$0xff] %vm1235, %v1195
    %1305 = vst.msk [vmem:[#allocation2 + $0x228] sm:$0xff] %vm1235, %v1196
    %1306 = vst.msk [vmem:[#allocation2 + $0x230] sm:$0xff] %vm1235, %v1197
    %1307 = vst.msk [vmem:[#allocation2 + $0x238] sm:$0xff] %vm1235, %v1198
    %1308 = vst.msk [vmem:[#allocation2 + $0x240] sm:$0xff] %vm1235, %v1199
    %1309 = vst.msk [vmem:[#allocation2 + $0x248] sm:$0xff] %vm1235, %v1200
    %1310 = vst.msk [vmem:[#allocation2 + $0x250] sm:$0xff] %vm1235, %v1201
    %1311 = vst.msk [vmem:[#allocation2 + $0x258] sm:$0xff] %vm1235, %v1202
    %1312 = vst.msk [vmem:[#allocation2 + $0x260] sm:$0xff] %vm1235, %v1203
    %1313 = vst.msk [vmem:[#allocation2 + $0x268] sm:$0xff] %vm1235, %v1204
    %1314 = vst.msk [vmem:[#allocation2 + $0x270] sm:$0xff] %vm1235, %v1205
    %1315 = vst.msk [vmem:[#allocation2 + $0x278] sm:$0xff] %vm1235, %v1206
    %1316 = vst.msk [vmem:[#allocation2 + $0x280] sm:$0xff] %vm1235, %v1207
    %1317 = vst.msk [vmem:[#allocation2 + $0x288] sm:$0xff] %vm1235, %v1208
    %1318 = vst.msk [vmem:[#allocation2 + $0x290] sm:$0xff] %vm1235, %v1209
    %1319 = vst.msk [vmem:[#allocation2 + $0x298] sm:$0xff] %vm1235, %v1210
    %1320 = vst.msk [vmem:[#allocation2 + $0x2a0] sm:$0xff] %vm1235, %v1211
    %1321 = vst.msk [vmem:[#allocation2 + $0x2a8] sm:$0xff] %vm1235, %v1212
    %1322 = vst.msk [vmem:[#allocation2 + $0x2b0] sm:$0xff] %vm1235, %v1213
    %1323 = vst.msk [vmem:[#allocation2 + $0x2b8] sm:$0xff] %vm1235, %v1214
    %1324 = vst.msk [vmem:[#allocation2 + $0x2c0] sm:$0xff] %vm1235, %v1215
    %1325 = vst.msk [vmem:[#allocation2 + $0x2c8] sm:$0xff] %vm1235, %v1216
    %1326 = vst.msk [vmem:[#allocation2 + $0x2d0] sm:$0xff] %vm1235, %v1217
    %1327 = vst.msk [vmem:[#allocation2 + $0x2d8] sm:$0xff] %vm1235, %v1218
    %1328 = vst.msk [vmem:[#allocation2 + $0x2e0] sm:$0xff] %vm1235, %v1219
    %1329 = vst.msk [vmem:[#allocation2 + $0x2e8] sm:$0xff] %vm1235, %v1220
    %1330 = vst.msk [vmem:[#allocation2 + $0x2f0] sm:$0xff] %vm1235, %v1221
    %1331 = vst.msk [vmem:[#allocation2 + $0x2f8] sm:$0xff] %vm1235, %v1222
    %1332 = vst.msk [vmem:[#allocation2 + $0x300] sm:$0xff] %vm1235, %v1223
    %1333 = vst.msk [vmem:[#allocation2 + $0x308] sm:$0xff] %vm1235, %v1224
    %1334 = vst.msk [vmem:[#allocation2 + $0x310] sm:$0xff] %vm1235, %v1225
    %1335 = vst.msk [vmem:[#allocation2 + $0x318] sm:$0xff] %vm1235, %v1226
    %1336 = vst.msk [vmem:[#allocation2 + $0x320] sm:$0xff] %vm1235, %v1227
    %1337 = vst.msk [vmem:[#allocation2 + $0x328] sm:$0xff] %vm1235, %v1228
    %1338 = vst.msk [vmem:[#allocation2 + $0x330] sm:$0xff] %vm1235, %v1229
    %1339 = vst.msk [vmem:[#allocation2 + $0x338] sm:$0xff] %vm1235, %v1230
    %1340 = vst.msk [vmem:[#allocation2 + $0x340] sm:$0xff] %vm1235, %v1231
    %1341 = vst.msk [vmem:[#allocation2 + $0x348] sm:$0xff] %vm1235, %v1232
    %1342 = vst.msk [vmem:[#allocation2 + $0x350] sm:$0xff] %vm1235, %v1233
    %1343 = vst.msk [vmem:[#allocation2 + $0x358] sm:$0xff] %vm1235, %v1234
    %v1344 = vld [vmem:[#allocation2] sm:$0xff]
    %v1345 = vld [vmem:[#allocation2 + $0x8] sm:$0xff]
    %v1346 = vld [vmem:[#allocation2 + $0x10] sm:$0xff]
    %v1347 = vld [vmem:[#allocation2 + $0x18] sm:$0xff]
    %v1348 = vld [vmem:[#allocation2 + $0x20] sm:$0xff]
    %v1349 = vld [vmem:[#allocation2 + $0x28] sm:$0xff]
    %v1350 = vld [vmem:[#allocation2 + $0x30] sm:$0xff]
    %v1351 = vld [vmem:[#allocation2 + $0x38] sm:$0xff]
    %v1352 = vld [vmem:[#allocation2 + $0x40] sm:$0xff]
    %v1353 = vld [vmem:[#allocation2 + $0x48] sm:$0xff]
    %v1354 = vld [vmem:[#allocation2 + $0x50] sm:$0xff]
    %v1355 = vld [vmem:[#allocation2 + $0x58] sm:$0xff]
    %v1356 = vld [vmem:[#allocation2 + $0x60] sm:$0xff]
    %v1357 = vld [vmem:[#allocation2 + $0x68] sm:$0xff]
    %v1358 = vld [vmem:[#allocation2 + $0x70] sm:$0xff]
    %v1359 = vld [vmem:[#allocation2 + $0x78] sm:$0xff]
    %v1360 = vld [vmem:[#allocation2 + $0x80] sm:$0xff]
    %v1361 = vld [vmem:[#allocation2 + $0x88] sm:$0xff]
    %v1362 = vld [vmem:[#allocation2 + $0x90] sm:$0xff]
    %v1363 = vld [vmem:[#allocation2 + $0x98] sm:$0xff]
    %v1364 = vld [vmem:[#allocation2 + $0xa0] sm:$0xff]
    %v1365 = vld [vmem:[#allocation2 + $0xa8] sm:$0xff]
    %v1366 = vld [vmem:[#allocation2 + $0xb0] sm:$0xff]
    %v1367 = vld [vmem:[#allocation2 + $0xb8] sm:$0xff]
    %v1368 = vld [vmem:[#allocation2 + $0xc0] sm:$0xff]
    %v1369 = vld [vmem:[#allocation2 + $0xc8] sm:$0xff]
    %v1370 = vld [vmem:[#allocation2 + $0xd0] sm:$0xff]
    %v1371 = vld [vmem:[#allocation2 + $0xd8] sm:$0xff]
    %v1372 = vld [vmem:[#allocation2 + $0xe0] sm:$0xff]
    %v1373 = vld [vmem:[#allocation2 + $0xe8] sm:$0xff]
    %v1374 = vld [vmem:[#allocation2 + $0xf0] sm:$0xff]
    %v1375 = vld [vmem:[#allocation2 + $0xf8] sm:$0xff]
    %v1376 = vld [vmem:[#allocation2 + $0x100] sm:$0xff]
    %v1377 = vld [vmem:[#allocation2 + $0x108] sm:$0xff]
    %v1378 = vld [vmem:[#allocation2 + $0x110] sm:$0xff]
    %v1379 = vld [vmem:[#allocation2 + $0x118] sm:$0xff]
    %v1380 = vld [vmem:[#allocation2 + $0x120] sm:$0xff]
    %v1381 = vld [vmem:[#allocation2 + $0x128] sm:$0xff]
    %v1382 = vld [vmem:[#allocation2 + $0x130] sm:$0xff]
    %v1383 = vld [vmem:[#allocation2 + $0x138] sm:$0xff]
    %v1384 = vld [vmem:[#allocation2 + $0x140] sm:$0xff]
    %v1385 = vld [vmem:[#allocation2 + $0x148] sm:$0xff]
    %v1386 = vld [vmem:[#allocation2 + $0x150] sm:$0xff]
    %v1387 = vld [vmem:[#allocation2 + $0x158] sm:$0xff]
    %v1388 = vld [vmem:[#allocation2 + $0x160] sm:$0xff]
    %v1389 = vld [vmem:[#allocation2 + $0x168] sm:$0xff]
    %v1390 = vld [vmem:[#allocation2 + $0x170] sm:$0xff]
    %v1391 = vld [vmem:[#allocation2 + $0x178] sm:$0xff]
    %v1392 = vld [vmem:[#allocation2 + $0x180] sm:$0xff]
    %v1393 = vld [vmem:[#allocation2 + $0x188] sm:$0xff]
    %v1394 = vld [vmem:[#allocation2 + $0x190] sm:$0xff]
    %v1395 = vld [vmem:[#allocation2 + $0x198] sm:$0xff]
    %v1396 = vld [vmem:[#allocation2 + $0x1a0] sm:$0xff]
    %v1397 = vld [vmem:[#allocation2 + $0x1a8] sm:$0xff]
    %v1398 = vld [vmem:[#allocation2 + $0x1b0] sm:$0xff]
    %v1399 = vld [vmem:[#allocation2 + $0x1b8] sm:$0xff]
    %v1400 = vld [vmem:[#allocation2 + $0x1c0] sm:$0xff]
    %v1401 = vld [vmem:[#allocation2 + $0x1c8] sm:$0xff]
    %v1402 = vld [vmem:[#allocation2 + $0x1d0] sm:$0xff]
    %v1403 = vld [vmem:[#allocation2 + $0x1d8] sm:$0xff]
    %v1404 = vld [vmem:[#allocation2 + $0x1e0] sm:$0xff]
    %v1405 = vld [vmem:[#allocation2 + $0x1e8] sm:$0xff]
    %v1406 = vld [vmem:[#allocation2 + $0x1f0] sm:$0xff]
    %v1407 = vld [vmem:[#allocation2 + $0x1f8] sm:$0xff]
    %v1408 = vld [vmem:[#allocation2 + $0x200] sm:$0xff]
    %v1409 = vld [vmem:[#allocation2 + $0x208] sm:$0xff]
    %v1410 = vld [vmem:[#allocation2 + $0x210] sm:$0xff]
    %v1411 = vld [vmem:[#allocation2 + $0x218] sm:$0xff]
    %v1412 = vld [vmem:[#allocation2 + $0x220] sm:$0xff]
    %v1413 = vld [vmem:[#allocation2 + $0x228] sm:$0xff]
    %v1414 = vld [vmem:[#allocation2 + $0x230] sm:$0xff]
    %v1415 = vld [vmem:[#allocation2 + $0x238] sm:$0xff]
    %v1416 = vld [vmem:[#allocation2 + $0x240] sm:$0xff]
    %v1417 = vld [vmem:[#allocation2 + $0x248] sm:$0xff]
    %v1418 = vld [vmem:[#allocation2 + $0x250] sm:$0xff]
    %v1419 = vld [vmem:[#allocation2 + $0x258] sm:$0xff]
    %v1420 = vld [vmem:[#allocation2 + $0x260] sm:$0xff]
    %v1421 = vld [vmem:[#allocation2 + $0x268] sm:$0xff]
    %v1422 = vld [vmem:[#allocation2 + $0x270] sm:$0xff]
    %v1423 = vld [vmem:[#allocation2 + $0x278] sm:$0xff]
    %v1424 = vld [vmem:[#allocation2 + $0x280] sm:$0xff]
    %v1425 = vld [vmem:[#allocation2 + $0x288] sm:$0xff]
    %v1426 = vld [vmem:[#allocation2 + $0x290] sm:$0xff]
    %v1427 = vld [vmem:[#allocation2 + $0x298] sm:$0xff]
    %v1428 = vld [vmem:[#allocation2 + $0x2a0] sm:$0xff]
    %v1429 = vld [vmem:[#allocation2 + $0x2a8] sm:$0xff]
    %v1430 = vld [vmem:[#allocation2 + $0x2b0] sm:$0xff]
    %v1431 = vld [vmem:[#allocation2 + $0x2b8] sm:$0xff]
    %v1432 = vld [vmem:[#allocation2 + $0x2c0] sm:$0xff]
    %v1433 = vld [vmem:[#allocation2 + $0x2c8] sm:$0xff]
    %v1434 = vld [vmem:[#allocation2 + $0x2d0] sm:$0xff]
    %v1435 = vld [vmem:[#allocation2 + $0x2d8] sm:$0xff]
    %v1436 = vld [vmem:[#allocation2 + $0x2e0] sm:$0xff]
    %v1437 = vld [vmem:[#allocation2 + $0x2e8] sm:$0xff]
    %v1438 = vld [vmem:[#allocation2 + $0x2f0] sm:$0xff]
    %v1439 = vld [vmem:[#allocation2 + $0x2f8] sm:$0xff]
    %v1440 = vld [vmem:[#allocation2 + $0x300] sm:$0xff]
    %v1441 = vld [vmem:[#allocation2 + $0x308] sm:$0xff]
    %v1442 = vld [vmem:[#allocation2 + $0x310] sm:$0xff]
    %v1443 = vld [vmem:[#allocation2 + $0x318] sm:$0xff]
    %v1444 = vld [vmem:[#allocation2 + $0x320] sm:$0xff]
    %v1445 = vld [vmem:[#allocation2 + $0x328] sm:$0xff]
    %v1446 = vld [vmem:[#allocation2 + $0x330] sm:$0xff]
    %v1447 = vld [vmem:[#allocation2 + $0x338] sm:$0xff]
    %v1448 = vld [vmem:[#allocation2 + $0x340] sm:$0xff]
    %v1449 = vld [vmem:[#allocation2 + $0x348] sm:$0xff]
    %v1450 = vld [vmem:[#allocation2 + $0x350] sm:$0xff]
    %v1451 = vld [vmem:[#allocation2 + $0x358] sm:$0xff]
    %v1452 = vmax.f32 %v1344, %v1347
    %v1453 = vmax.f32 %v1345, %v1348
    %v1454 = vmax.f32 %v1346, %v1349
    %v1455 = vmax.f32 %v1350, %v1353
    %v1456 = vmax.f32 %v1351, %v1354
    %v1457 = vmax.f32 %v1352, %v1355
    %v1458 = vmax.f32 %v1356, %v1359
    %v1459 = vmax.f32 %v1357, %v1360
    %v1460 = vmax.f32 %v1358, %v1361
    %v1461 = vmax.f32 %v1362, %v1365
    %v1462 = vmax.f32 %v1363, %v1366
    %v1463 = vmax.f32 %v1364, %v1367
    %v1464 = vmax.f32 %v1368, %v1371
    %v1465 = vmax.f32 %v1369, %v1372
    %v1466 = vmax.f32 %v1370, %v1373
    %v1467 = vmax.f32 %v1374, %v1377
    %v1468 = vmax.f32 %v1375, %v1378
    %v1469 = vmax.f32 %v1376, %v1379
    %v1470 = vmax.f32 %v1380, %v1383
    %v1471 = vmax.f32 %v1381, %v1384
    %v1472 = vmax.f32 %v1382, %v1385
    %v1473 = vmax.f32 %v1386, %v1389
    %v1474 = vmax.f32 %v1387, %v1390
    %v1475 = vmax.f32 %v1388, %v1391
    %v1476 = vmax.f32 %v1392, %v1395
    %v1477 = vmax.f32 %v1393, %v1396
    %v1478 = vmax.f32 %v1394, %v1397
    %v1479 = vmax.f32 %v1398, %v1401
    %v1480 = vmax.f32 %v1399, %v1402
    %v1481 = vmax.f32 %v1400, %v1403
    %v1482 = vmax.f32 %v1404, %v1407
    %v1483 = vmax.f32 %v1405, %v1408
    %v1484 = vmax.f32 %v1406, %v1409
    %v1485 = vmax.f32 %v1410, %v1413
    %v1486 = vmax.f32 %v1411, %v1414
    %v1487 = vmax.f32 %v1412, %v1415
    %v1488 = vmax.f32 %v1416, %v1419
    %v1489 = vmax.f32 %v1417, %v1420
    %v1490 = vmax.f32 %v1418, %v1421
    %v1491 = vmax.f32 %v1422, %v1425
    %v1492 = vmax.f32 %v1423, %v1426
    %v1493 = vmax.f32 %v1424, %v1427
    %v1494 = vmax.f32 %v1428, %v1431
    %v1495 = vmax.f32 %v1429, %v1432
    %v1496 = vmax.f32 %v1430, %v1433
    %v1497 = vmax.f32 %v1434, %v1437
    %v1498 = vmax.f32 %v1435, %v1438
    %v1499 = vmax.f32 %v1436, %v1439
    %v1500 = vmax.f32 %v1440, %v1443
    %v1501 = vmax.f32 %v1441, %v1444
    %v1502 = vmax.f32 %v1442, %v1445
    %v1503 = vmax.f32 %v1446, %v1449
    %v1504 = vmax.f32 %v1447, %v1450
    %v1505 = vmax.f32 %v1448, %v1451
    %v1506 = vmax.f32 %v1452, %v1455
    %v1507 = vmax.f32 %v1453, %v1456
    %v1508 = vmax.f32 %v1454, %v1457
    %v1509 = vmax.f32 %v1458, %v1461
    %v1510 = vmax.f32 %v1459, %v1462
    %v1511 = vmax.f32 %v1460, %v1463
    %v1512 = vmax.f32 %v1464, %v1467
    %v1513 = vmax.f32 %v1465, %v1468
    %v1514 = vmax.f32 %v1466, %v1469
    %v1515 = vmax.f32 %v1470, %v1473
    %v1516 = vmax.f32 %v1471, %v1474
    %v1517 = vmax.f32 %v1472, %v1475
    %v1518 = vmax.f32 %v1476, %v1479
    %v1519 = vmax.f32 %v1477, %v1480
    %v1520 = vmax.f32 %v1478, %v1481
    %v1521 = vmax.f32 %v1482, %v1485
    %v1522 = vmax.f32 %v1483, %v1486
    %v1523 = vmax.f32 %v1484, %v1487
    %v1524 = vmax.f32 %v1488, %v1491
    %v1525 = vmax.f32 %v1489, %v1492
    %v1526 = vmax.f32 %v1490, %v1493
    %v1527 = vmax.f32 %v1494, %v1497
    %v1528 = vmax.f32 %v1495, %v1498
    %v1529 = vmax.f32 %v1496, %v1499
    %v1530 = vmax.f32 %v1500, %v1503
    %v1531 = vmax.f32 %v1501, %v1504
    %v1532 = vmax.f32 %v1502, %v1505
    %v1533 = vmax.f32 %v1506, %v1509
    %v1534 = vmax.f32 %v1507, %v1510
    %v1535 = vmax.f32 %v1508, %v1511
    %v1536 = vmax.f32 %v1512, %v1515
    %v1537 = vmax.f32 %v1513, %v1516
    %v1538 = vmax.f32 %v1514, %v1517
    %v1539 = vmax.f32 %v1518, %v1521
    %v1540 = vmax.f32 %v1519, %v1522
    %v1541 = vmax.f32 %v1520, %v1523
    %v1542 = vmax.f32 %v1524, %v1527
    %v1543 = vmax.f32 %v1525, %v1528
    %v1544 = vmax.f32 %v1526, %v1529
    %v1545 = vmax.f32 %v1533, %v1536
    %v1546 = vmax.f32 %v1534, %v1537
    %v1547 = vmax.f32 %v1535, %v1538
    %v1548 = vmax.f32 %v1539, %v1542
    %v1549 = vmax.f32 %v1540, %v1543
    %v1550 = vmax.f32 %v1541, %v1544
    %v1551 = vmax.f32 %v1545, %v1548
    %v1552 = vmax.f32 %v1546, %v1549
    %v1553 = vmax.f32 %v1547, %v1550
    %v1554 = vmax.f32 %v1551, %v1530
    %v1555 = vmax.f32 %v1552, %v1531
    %v1556 = vmax.f32 %v1553, %v1532
    %v1557 = vld [vmem:[%s1] sm:$0xf]
    %v1558 = vld [vmem:[%s1 + $0x4] sm:$0xf]
    %v1559 = vld [vmem:[%s1 + $0x8] sm:$0xf]
    %v1560 = vld [vmem:[%s1 + $0xc] sm:$0xf]
    %v1561 = vld [vmem:[%s1 + $0x10] sm:$0xf]
    %v1562 = vld [vmem:[%s1 + $0x14] sm:$0xf]
    %v1563 = vld [vmem:[%s1 + $0x18] sm:$0xf]
    %v1564 = vld [vmem:[%s1 + $0x1c] sm:$0xf]
    %v1565 = vld [vmem:[%s1 + $0x20] sm:$0xf]
    %v1566 = vld [vmem:[%s1 + $0x24] sm:$0xf]
    %v1567 = vld [vmem:[%s1 + $0x28] sm:$0xf]
    %v1568 = vld [vmem:[%s1 + $0x2c] sm:$0xf]
    %v1569 = vld [vmem:[%s1 + $0x30] sm:$0xf]
    %v1570 = vld [vmem:[%s1 + $0x34] sm:$0xf]
    %v1571 = vld [vmem:[%s1 + $0x38] sm:$0xf]
    %v1572 = vld [vmem:[%s1 + $0x3c] sm:$0xf]
    %v1573 = vld [vmem:[%s1 + $0x40] sm:$0xf]
    %v1574 = vld [vmem:[%s1 + $0x44] sm:$0xf]
    %v1575 = vld [vmem:[%s4] sm:$0xf]
    %v1576 = vld [vmem:[%s4 + $0x4] sm:$0xf]
    %v1577 = vld [vmem:[%s4 + $0x8] sm:$0xf]
    %v1578 = vld [vmem:[%s4 + $0xc] sm:$0xf]
    %v1579 = vld [vmem:[%s4 + $0x10] sm:$0xf]
    %v1580 = vld [vmem:[%s4 + $0x14] sm:$0xf]
    %v1581 = vld [vmem:[%s4 + $0x18] sm:$0x7]
    %v1582 = vld [vmem:[%s5] sm:$0x1]
    %v1584 = vlaneseq
    %v1585 = vshrl.u32 %v1584, 7
    %v1586 = vsub.s32 0, %v1585
    %v1587 = vrot.slane %v1582, %v1586
    %v1607 = vunpack.c.l.b16 %v1557
    %v1608 = vunpack.c.l.b16 %v1558
    %v1609 = vunpack.c.l.b16 %v1559
    %v1610 = vunpack.c.l.b16 %v1560
    %v1611 = vunpack.c.l.b16 %v1561
    %v1612 = vunpack.c.l.b16 %v1562
    %v1613 = vunpack.c.l.b16 %v1563
    %v1614 = vunpack.c.l.b16 %v1564
    %v1615 = vunpack.c.l.b16 %v1565
    %v1616 = vunpack.c.l.b16 %v1566
    %v1617 = vunpack.c.l.b16 %v1567
    %v1618 = vunpack.c.l.b16 %v1568
    %v1619 = vunpack.c.l.b16 %v1569
    %v1620 = vunpack.c.l.b16 %v1570
    %v1621 = vunpack.c.l.b16 %v1571
    %v1622 = vunpack.c.l.b16 %v1572
    %v1623 = vunpack.c.l.b16 %v1573
    %v1624 = vunpack.c.l.b16 %v1574
    %v1625 = vpack.c.b16 %v1608, %v1607
    %v1626 = vpack.c.b16 %v1610, %v1609
    %v1627 = vpack.c.b16 %v1612, %v1611
    %v1628 = vpack.c.b16 %v1614, %v1613
    %v1629 = vpack.c.b16 %v1616, %v1615
    %v1630 = vpack.c.b16 %v1618, %v1617
    %v1631 = vpack.c.b16 %v1620, %v1619
    %v1632 = vpack.c.b16 %v1622, %v1621
    %v1633 = vpack.c.b16 %v1624, %v1623
    %v1641 = vunpack.c.l.b16 %v1575
    %v1642 = vunpack.c.l.b16 %v1576
    %v1643 = vunpack.c.l.b16 %v1577
    %v1644 = vunpack.c.l.b16 %v1578
    %v1645 = vunpack.c.l.b16 %v1579
    %v1646 = vunpack.c.l.b16 %v1580
    %v1647 = vunpack.c.l.b16 %v1581
    %v1648 = vpack.c.b16 %v1642, %v1641
    %v1649 = vpack.c.b16 %v1644, %v1643
    %v1650 = vpack.c.b16 %v1646, %v1645
    %v1651 = vpack.c.b16 %v1647, %v1647
    %vm1655 = vcmask 441344
    %v1657 = vsel %vm1655, %v1625, 0
    %v1660 = vsel %vm1655, %v1626, 0
    %v1663 = vsel %vm1655, %v1627, 0
    %v1666 = vsel %vm1655, %v1628, 0
    %v1669 = vsel %vm1655, %v1629, 0
    %v1672 = vsel %vm1655, %v1630, 0
    %v1675 = vsel %vm1655, %v1631, 0
    %v1678 = vsel %vm1655, %v1632, 0
    %v1681 = vsel %vm1655, %v1633, 0
    %vm1683 = vcmask 1042432
    %v1685 = vsel %vm1683, %v1651, 0
    %1687 = vmatprep.subr.bf16.mxu0 0
    %1688 = vmatpush1.bf16.msra.mxu0 0
    %1689 = vmatprep.subr.bf16.mxu0 0
    %1690 = vmatpush1.bf16.msra.mxu0 0
    %1691 = vmatprep.subr.bf16.mxu0 0
    %1692 = vmatpush1.bf16.msra.mxu0 0
    %1693 = vmatprep.subr.bf16.mxu0 0
    %1694 = vmatpush1.bf16.msra.mxu0 0
    %1695 = vmatprep.subr.bf16.mxu0 0
    %1696 = vmatpush1.bf16.msra.mxu0 %v1685
    %1697 = vmatprep.subr.bf16.mxu0 0
    %1698 = vmatpush1.bf16.msra.mxu0 %v1650
    %1699 = vmatprep.subr.bf16.mxu0 0
    %1700 = vmatpush1.bf16.msra.mxu0 %v1649
    %1701 = vmatprep.subr.bf16.mxu0 0
    %1702 = vmatpush1.bf16.msra.mxu0 %v1648
    %1703 = vmatprep.subr.bf16.mxu0 0
    %1704 = vmatpush2.bf16.msra.mxu0 0
    %1705 = vmatprep.subr.bf16.mxu0 0
    %1706 = vmatpush2.bf16.msra.mxu0 0
    %1707 = vmatprep.subr.bf16.mxu0 0
    %1708 = vmatpush2.bf16.msra.mxu0 0
    %1709 = vmatprep.subr.bf16.mxu0 0
    %1710 = vmatpush2.bf16.msra.mxu0 0
    %1711 = vmatprep.subr.bf16.mxu0 0
    %1712 = vmatpush2.bf16.msra.mxu0 0
    %1713 = vmatprep.subr.bf16.mxu0 0
    %1714 = vmatpush2.bf16.msra.mxu0 0
    %1715 = vmatprep.subr.bf16.mxu0 0
    %1716 = vmatpush2.bf16.msra.mxu0 0
    %1717 = vmatprep.subr.bf16.mxu0 0
    %1718 = vmatpush2.bf16.msra.mxu0 0
    %1719 = vmatprep.mubr.bf16.mxu0 0
    %1720 = vmatmul.mubr.bf16.gmra.mxu0 %v1657
    %v1721 = vpop.f32.mrf.mxu0
    %v1722 = vadd.f32 %v1587, %v1721
    %v1723 = vpop.f32.mrf.mxu0
    %v1724 = vpop.f32.mrf.mxu0
    %v1725 = vadd.f32 %v1587, %v1724
    %v1726 = vpop.f32.mrf.mxu0
    %1727 = vmatprep.mubr.bf16.mxu0 0
    %1728 = vmatmul.mubr.bf16.gmra.mxu0 %v1660
    %v1729 = vpop.f32.mrf.mxu0
    %v1730 = vadd.f32 %v1587, %v1729
    %v1731 = vpop.f32.mrf.mxu0
    %v1732 = vpop.f32.mrf.mxu0
    %v1733 = vadd.f32 %v1587, %v1732
    %v1734 = vpop.f32.mrf.mxu0
    %1735 = vmatprep.mubr.bf16.mxu0 0
    %1736 = vmatmul.mubr.bf16.gmra.mxu0 %v1663
    %v1737 = vpop.f32.mrf.mxu0
    %v1738 = vadd.f32 %v1587, %v1737
    %v1739 = vpop.f32.mrf.mxu0
    %v1740 = vpop.f32.mrf.mxu0
    %v1741 = vadd.f32 %v1587, %v1740
    %v1742 = vpop.f32.mrf.mxu0
    %1743 = vmatprep.mubr.bf16.mxu0 0
    %1744 = vmatmul.mubr.bf16.gmra.mxu0 %v1666
    %v1745 = vpop.f32.mrf.mxu0
    %v1746 = vadd.f32 %v1587, %v1745
    %v1747 = vpop.f32.mrf.mxu0
    %v1748 = vpop.f32.mrf.mxu0
    %v1749 = vadd.f32 %v1587, %v1748
    %v1750 = vpop.f32.mrf.mxu0
    %1751 = vmatprep.mubr.bf16.mxu0 0
    %1752 = vmatmul.mubr.bf16.gmra.mxu0 %v1669
    %v1753 = vpop.f32.mrf.mxu0
    %v1754 = vadd.f32 %v1587, %v1753
    %v1755 = vpop.f32.mrf.mxu0
    %v1756 = vpop.f32.mrf.mxu0
    %v1757 = vadd.f32 %v1587, %v1756
    %v1758 = vpop.f32.mrf.mxu0
    %1759 = vmatprep.mubr.bf16.mxu0 0
    %1760 = vmatmul.mubr.bf16.gmra.mxu0 %v1672
    %v1761 = vpop.f32.mrf.mxu0
    %v1762 = vadd.f32 %v1587, %v1761
    %v1763 = vpop.f32.mrf.mxu0
    %v1764 = vpop.f32.mrf.mxu0
    %v1765 = vadd.f32 %v1587, %v1764
    %v1766 = vpop.f32.mrf.mxu0
    %1767 = vmatprep.mubr.bf16.mxu0 0
    %1768 = vmatmul.mubr.bf16.gmra.mxu0 %v1675
    %v1769 = vpop.f32.mrf.mxu0
    %v1770 = vadd.f32 %v1587, %v1769
    %v1771 = vpop.f32.mrf.mxu0
    %v1772 = vpop.f32.mrf.mxu0
    %v1773 = vadd.f32 %v1587, %v1772
    %v1774 = vpop.f32.mrf.mxu0
    %1775 = vmatprep.mubr.bf16.mxu0 0
    %1776 = vmatmul.mubr.bf16.gmra.mxu0 %v1678
    %v1777 = vpop.f32.mrf.mxu0
    %v1778 = vadd.f32 %v1587, %v1777
    %v1779 = vpop.f32.mrf.mxu0
    %v1780 = vpop.f32.mrf.mxu0
    %v1781 = vadd.f32 %v1587, %v1780
    %v1782 = vpop.f32.mrf.mxu0
    %1783 = vmatprep.mubr.bf16.mxu0 0
    %1784 = vmatmul.mubr.bf16.gmra.mxu0 %v1681
    %v1785 = vpop.f32.mrf.mxu0
    %v1786 = vadd.f32 %v1587, %v1785
    %v1787 = vpop.f32.mrf.mxu0
    %v1788 = vpop.f32.mrf.mxu0
    %v1789 = vadd.f32 %v1587, %v1788
    %v1790 = vpop.f32.mrf.mxu0
    %1791 = vdwg.mxu0
    %v1792 = vmax.f32 %v1722, 0.0
    %v1793 = vmax.f32 %v1725, 0.0
    %v1794 = vmax.f32 %v1730, 0.0
    %v1795 = vmax.f32 %v1733, 0.0
    %v1796 = vmax.f32 %v1738, 0.0
    %v1797 = vmax.f32 %v1741, 0.0
    %v1798 = vmax.f32 %v1746, 0.0
    %v1799 = vmax.f32 %v1749, 0.0
    %v1800 = vmax.f32 %v1754, 0.0
    %v1801 = vmax.f32 %v1757, 0.0
    %v1802 = vmax.f32 %v1762, 0.0
    %v1803 = vmax.f32 %v1765, 0.0
    %v1804 = vmax.f32 %v1770, 0.0
    %v1805 = vmax.f32 %v1773, 0.0
    %v1806 = vmax.f32 %v1778, 0.0
    %v1807 = vmax.f32 %v1781, 0.0
    %v1808 = vmax.f32 %v1786, 0.0
    %v1809 = vmax.f32 %v1789, 0.0
    %1810 = vst.msk [vmem:[#allocation3] sm:$0xff] %vm1235, %v1792
    %1811 = vst.msk [vmem:[#allocation3 + $0x8] sm:$0xff] %vm1235, %v1793
    %1812 = vst.msk [vmem:[#allocation3 + $0x10] sm:$0xff] %vm1235, %v1794
    %1813 = vst.msk [vmem:[#allocation3 + $0x18] sm:$0xff] %vm1235, %v1795
    %1814 = vst.msk [vmem:[#allocation3 + $0x20] sm:$0xff] %vm1235, %v1796
    %1815 = vst.msk [vmem:[#allocation3 + $0x28] sm:$0xff] %vm1235, %v1797
    %1816 = vst.msk [vmem:[#allocation3 + $0x30] sm:$0xff] %vm1235, %v1798
    %1817 = vst.msk [vmem:[#allocation3 + $0x38] sm:$0xff] %vm1235, %v1799
    %1818 = vst.msk [vmem:[#allocation3 + $0x40] sm:$0xff] %vm1235, %v1800
    %1819 = vst.msk [vmem:[#allocation3 + $0x48] sm:$0xff] %vm1235, %v1801
    %1820 = vst.msk [vmem:[#allocation3 + $0x50] sm:$0xff] %vm1235, %v1802
    %1821 = vst.msk [vmem:[#allocation3 + $0x58] sm:$0xff] %vm1235, %v1803
    %1822 = vst.msk [vmem:[#allocation3 + $0x60] sm:$0xff] %vm1235, %v1804
    %1823 = vst.msk [vmem:[#allocation3 + $0x68] sm:$0xff] %vm1235, %v1805
    %1824 = vst.msk [vmem:[#allocation3 + $0x70] sm:$0xff] %vm1235, %v1806
    %1825 = vst.msk [vmem:[#allocation3 + $0x78] sm:$0xff] %vm1235, %v1807
    %1826 = vst.msk [vmem:[#allocation3 + $0x80] sm:$0xff] %vm1235, %v1808
    %1827 = vst.msk [vmem:[#allocation3 + $0x88] sm:$0xff] %vm1235, %v1809
    %v1828 = vld [vmem:[#allocation3] sm:$0xff]
    %v1829 = vld [vmem:[#allocation3 + $0x8] sm:$0xff]
    %v1830 = vld [vmem:[#allocation3 + $0x10] sm:$0xff]
    %v1831 = vld [vmem:[#allocation3 + $0x18] sm:$0xff]
    %v1832 = vld [vmem:[#allocation3 + $0x20] sm:$0xff]
    %v1833 = vld [vmem:[#allocation3 + $0x28] sm:$0xff]
    %v1834 = vld [vmem:[#allocation3 + $0x30] sm:$0xff]
    %v1835 = vld [vmem:[#allocation3 + $0x38] sm:$0xff]
    %v1836 = vld [vmem:[#allocation3 + $0x40] sm:$0xff]
    %v1837 = vld [vmem:[#allocation3 + $0x48] sm:$0xff]
    %v1838 = vld [vmem:[#allocation3 + $0x50] sm:$0xff]
    %v1839 = vld [vmem:[#allocation3 + $0x58] sm:$0xff]
    %v1840 = vld [vmem:[#allocation3 + $0x60] sm:$0xff]
    %v1841 = vld [vmem:[#allocation3 + $0x68] sm:$0xff]
    %v1842 = vld [vmem:[#allocation3 + $0x70] sm:$0xff]
    %v1843 = vld [vmem:[#allocation3 + $0x78] sm:$0xff]
    %v1844 = vld [vmem:[#allocation3 + $0x80] sm:$0xff]
    %v1845 = vld [vmem:[#allocation3 + $0x88] sm:$0xff]
    %v1846 = vmax.f32 %v1828, %v1831
    %v1847 = vmax.f32 %v1829, %v1832
    %v1848 = vmax.f32 %v1830, %v1833
    %v1849 = vmax.f32 %v1834, %v1837
    %v1850 = vmax.f32 %v1835, %v1838
    %v1851 = vmax.f32 %v1836, %v1839
    %v1852 = vmax.f32 %v1840, %v1843
    %v1853 = vmax.f32 %v1841, %v1844
    %v1854 = vmax.f32 %v1842, %v1845
    %v1855 = vmax.f32 %v1846, %v1849
    %v1856 = vmax.f32 %v1847, %v1850
    %v1857 = vmax.f32 %v1848, %v1851
    %v1858 = vmax.f32 %v1855, %v1852
    %v1859 = vmax.f32 %v1856, %v1853
    %v1860 = vmax.f32 %v1857, %v1854
    %v1861 = vld [vmem:[%s6] sm:$0xff]
    %v1862 = vld [vmem:[%s6 + $0x8] sm:$0xff]
    %v1864 = vsel %vm1235, %v1554, 0
    %v1867 = vsel %vm1235, %v1555, 0
    %v1870 = vsel %vm1235, %v1556, 0
    %1872 = vmatprep.subr.mxu0 0.0
    %1873 = vmatpush1.msra.mxu0 0.0
    %1874 = vmatprep.subr.mxu0 0.0
    %1875 = vmatpush1.msra.mxu0 0.0
    %1876 = vmatprep.subr.mxu0 0.0
    %1877 = vmatpush1.msra.mxu0 0.0
    %1878 = vmatprep.subr.mxu0 0.0
    %1879 = vmatpush1.msra.mxu0 0.0
    %1880 = vmatprep.subr.mxu0 0.0
    %1881 = vmatpush1.msra.mxu0 0.0
    %1882 = vmatprep.subr.mxu0 0.0
    %1883 = vmatpush1.msra.mxu0 0.0
    %1884 = vmatprep.subr.mxu0 0.0
    %1885 = vmatpush1.msra.mxu0 0.0
    %1886 = vmatprep.subr.mxu0 0.0
    %1887 = vmatpush1.msra.mxu0 0.0
    %1888 = vmatprep.subr.mxu0 0.0
    %1889 = vmatpush1.msra.mxu0 0.0
    %1890 = vmatprep.subr.mxu0 0.0
    %1891 = vmatpush1.msra.mxu0 0.0
    %1892 = vmatprep.subr.mxu0 0.0
    %1893 = vmatpush1.msra.mxu0 0.0
    %1894 = vmatprep.subr.mxu0 0.0
    %1895 = vmatpush1.msra.mxu0 0.0
    %1896 = vmatprep.subr.mxu0 0.0
    %1897 = vmatpush1.msra.mxu0 0.0
    %1898 = vmatprep.subr.mxu0 0.0
    %1899 = vmatpush1.msra.mxu0 0.0
    %1900 = vmatprep.subr.mxu0 0.0
    %1901 = vmatpush1.msra.mxu0 0.0
    %1902 = vmatprep.subr.mxu0 0.0
    %1903 = vmatpush1.msra.mxu0 %v1862
    %1904 = vmatprep.subr.mxu0 0.0
    %1905 = vmatpush2.msra.mxu0 0.0
    %1906 = vmatprep.subr.mxu0 0.0
    %1907 = vmatpush2.msra.mxu0 0.0
    %1908 = vmatprep.subr.mxu0 0.0
    %1909 = vmatpush2.msra.mxu0 0.0
    %1910 = vmatprep.subr.mxu0 0.0
    %1911 = vmatpush2.msra.mxu0 0.0
    %1912 = vmatprep.subr.mxu0 0.0
    %1913 = vmatpush2.msra.mxu0 0.0
    %1914 = vmatprep.subr.mxu0 0.0
    %1915 = vmatpush2.msra.mxu0 0.0
    %1916 = vmatprep.subr.mxu0 0.0
    %1917 = vmatpush2.msra.mxu0 0.0
    %1918 = vmatprep.subr.mxu0 0.0
    %1919 = vmatpush2.msra.mxu0 0.0
    %1920 = vmatprep.subr.mxu0 0.0
    %1921 = vmatpush2.msra.mxu0 0.0
    %1922 = vmatprep.subr.mxu0 0.0
    %1923 = vmatpush2.msra.mxu0 0.0
    %1924 = vmatprep.subr.mxu0 0.0
    %1925 = vmatpush2.msra.mxu0 0.0
    %1926 = vmatprep.subr.mxu0 0.0
    %1927 = vmatpush2.msra.mxu0 0.0
    %1928 = vmatprep.subr.mxu0 0.0
    %1929 = vmatpush2.msra.mxu0 0.0
    %1930 = vmatprep.subr.mxu0 0.0
    %1931 = vmatpush2.msra.mxu0 0.0
    %1932 = vmatprep.subr.mxu0 0.0
    %1933 = vmatpush2.msra.mxu0 0.0
    %1934 = vmatprep.subr.mxu0 0.0
    %1935 = vmatpush2.msra.mxu0 0.0
    %1936 = vmatprep.mubr.f32.mxu0 0.0
    %1937 = vmatmul.mubr.f32.gmra.mxu0 %v1864
    %v1938 = vpop.f32.mrf.mxu0
    %v1939 = vadd.f32 0.0, %v1938
    %v1940 = vpop.f32.mrf.mxu0
    %1941 = vmatprep.mubr.f32.mxu0 0.0
    %1942 = vmatmul.mubr.f32.gmra.mxu0 %v1867
    %v1943 = vpop.f32.mrf.mxu0
    %v1944 = vadd.f32 0.0, %v1943
    %v1945 = vpop.f32.mrf.mxu0
    %1946 = vmatprep.mubr.f32.mxu0 0.0
    %1947 = vmatmul.mubr.f32.gmra.mxu0 %v1870
    %v1948 = vpop.f32.mrf.mxu0
    %v1949 = vadd.f32 0.0, %v1948
    %v1950 = vpop.f32.mrf.mxu0
    %1951 = vdwg.mxu0
    %v1953 = vsel %vm1235, %v1858, 0
    %v1956 = vsel %vm1235, %v1859, 0
    %v1959 = vsel %vm1235, %v1860, 0
    %1961 = vmatprep.subr.mxu0 0.0
    %1962 = vmatpush1.msra.mxu0 0.0
    %1963 = vmatprep.subr.mxu0 0.0
    %1964 = vmatpush1.msra.mxu0 0.0
    %1965 = vmatprep.subr.mxu0 0.0
    %1966 = vmatpush1.msra.mxu0 0.0
    %1967 = vmatprep.subr.mxu0 0.0
    %1968 = vmatpush1.msra.mxu0 0.0
    %1969 = vmatprep.subr.mxu0 0.0
    %1970 = vmatpush1.msra.mxu0 0.0
    %1971 = vmatprep.subr.mxu0 0.0
    %1972 = vmatpush1.msra.mxu0 0.0
    %1973 = vmatprep.subr.mxu0 0.0
    %1974 = vmatpush1.msra.mxu0 0.0
    %1975 = vmatprep.subr.mxu0 0.0
    %1976 = vmatpush1.msra.mxu0 0.0
    %1977 = vmatprep.subr.mxu0 0.0
    %1978 = vmatpush1.msra.mxu0 0.0
    %1979 = vmatprep.subr.mxu0 0.0
    %1980 = vmatpush1.msra.mxu0 0.0
    %1981 = vmatprep.subr.mxu0 0.0
    %1982 = vmatpush1.msra.mxu0 0.0
    %1983 = vmatprep.subr.mxu0 0.0
    %1984 = vmatpush1.msra.mxu0 0.0
    %1985 = vmatprep.subr.mxu0 0.0
    %1986 = vmatpush1.msra.mxu0 0.0
    %1987 = vmatprep.subr.mxu0 0.0
    %1988 = vmatpush1.msra.mxu0 0.0
    %1989 = vmatprep.subr.mxu0 0.0
    %1990 = vmatpush1.msra.mxu0 0.0
    %1991 = vmatprep.subr.mxu0 0.0
    %1992 = vmatpush1.msra.mxu0 %v1861
    %1993 = vmatprep.subr.mxu0 0.0
    %1994 = vmatpush2.msra.mxu0 0.0
    %1995 = vmatprep.subr.mxu0 0.0
    %1996 = vmatpush2.msra.mxu0 0.0
    %1997 = vmatprep.subr.mxu0 0.0
    %1998 = vmatpush2.msra.mxu0 0.0
    %1999 = vmatprep.subr.mxu0 0.0
    %2000 = vmatpush2.msra.mxu0 0.0
    %2001 = vmatprep.subr.mxu0 0.0
    %2002 = vmatpush2.msra.mxu0 0.0
    %2003 = vmatprep.subr.mxu0 0.0
    %2004 = vmatpush2.msra.mxu0 0.0
    %2005 = vmatprep.subr.mxu0 0.0
    %2006 = vmatpush2.msra.mxu0 0.0
    %2007 = vmatprep.subr.mxu0 0.0
    %2008 = vmatpush2.msra.mxu0 0.0
    %2009 = vmatprep.subr.mxu0 0.0
    %2010 = vmatpush2.msra.mxu0 0.0
    %2011 = vmatprep.subr.mxu0 0.0
    %2012 = vmatpush2.msra.mxu0 0.0
    %2013 = vmatprep.subr.mxu0 0.0
    %2014 = vmatpush2.msra.mxu0 0.0
    %2015 = vmatprep.subr.mxu0 0.0
    %2016 = vmatpush2.msra.mxu0 0.0
    %2017 = vmatprep.subr.mxu0 0.0
    %2018 = vmatpush2.msra.mxu0 0.0
    %2019 = vmatprep.subr.mxu0 0.0
    %2020 = vmatpush2.msra.mxu0 0.0
    %2021 = vmatprep.subr.mxu0 0.0
    %2022 = vmatpush2.msra.mxu0 0.0
    %2023 = vmatprep.subr.mxu0 0.0
    %2024 = vmatpush2.msra.mxu0 0.0
    %2025 = vmatprep.mubr.f32.mxu0 0.0
    %2026 = vmatmul.mubr.f32.gmra.mxu0 %v1953
    %v2027 = vpop.f32.mrf.mxu0
    %v2028 = vadd.f32 %v1939, %v2027
    %v2029 = vpop.f32.mrf.mxu0
    %2030 = vmatprep.mubr.f32.mxu0 0.0
    %2031 = vmatmul.mubr.f32.gmra.mxu0 %v1956
    %v2032 = vpop.f32.mrf.mxu0
    %v2033 = vadd.f32 %v1944, %v2032
    %v2034 = vpop.f32.mrf.mxu0
    %2035 = vmatprep.mubr.f32.mxu0 0.0
    %2036 = vmatmul.mubr.f32.gmra.mxu0 %v1959
    %v2037 = vpop.f32.mrf.mxu0
    %v2038 = vadd.f32 %v1949, %v2037
    %v2039 = vpop.f32.mrf.mxu0
    %2040 = vdwg.mxu0
    %v2041 = vld [vmem:[%s7] sm:$0x1]
    %v2043 = vlaneseq
    %v2044 = vshrl.u32 %v2043, 7
    %v2045 = vsub.s32 0, %v2044
    %v2046 = vrot.slane %v2041, %v2045
    %v2048 = vadd.f32 %v2028, %v2046
    %v2049 = vadd.f32 %v2033, %v2046
    %v2050 = vadd.f32 %v2038, %v2046
    %v2052 = vrot.slane %v2048, 4
    %v2054 = vmax.f32 %v2048, %v2052
    %v2056 = vrot.slane %v2049, 4
    %v2058 = vmax.f32 %v2049, %v2056
    %v2060 = vrot.slane %v2050, 4
    %v2062 = vmax.f32 %v2050, %v2060
    %v2063 = vmax.f32 %v2054, %v2058
    %v2064 = vmax.f32 %v2063, %v2062
    %v2066 = vrot.slane %v2064, 2
    %v2068 = vadd.f32 %v2064, %v2066
    %v2069 = vld [vmem:[%s8] sm:$0xff]
    %v2070 = vld [vmem:[%s8 + $0x8] sm:$0xff]
    %v2071 = vld [vmem:[%s9] sm:$0x1]
    %v2073 = vlaneseq
    %v2074 = vshrl.u32 %v2073, 7
    %v2075 = vsub.s32 0, %v2074
    %v2076 = vrot.slane %v2071, %v2075
    %vm2078 = vcmask 130048
    %v2080 = vsel %vm2078, %v2068, 0
    %2082 = vmatprep.subr.mxu0 0.0
    %2083 = vmatpush1.msra.mxu0 0.0
    %2084 = vmatprep.subr.mxu0 0.0
    %2085 = vmatpush1.msra.mxu0 0.0
    %2086 = vmatprep.subr.mxu0 0.0
    %2087 = vmatpush1.msra.mxu0 0.0
    %2088 = vmatprep.subr.mxu0 0.0
    %2089 = vmatpush1.msra.mxu0 0.0
    %2090 = vmatprep.subr.mxu0 0.0
    %2091 = vmatpush1.msra.mxu0 0.0
    %2092 = vmatprep.subr.mxu0 0.0
    %2093 = vmatpush1.msra.mxu0 0.0
    %2094 = vmatprep.subr.mxu0 0.0
    %2095 = vmatpush1.msra.mxu0 0.0
    %2096 = vmatprep.subr.mxu0 0.0
    %2097 = vmatpush1.msra.mxu0 0.0
    %2098 = vmatprep.subr.mxu0 0.0
    %2099 = vmatpush1.msra.mxu0 0.0
    %2100 = vmatprep.subr.mxu0 0.0
    %2101 = vmatpush1.msra.mxu0 0.0
    %2102 = vmatprep.subr.mxu0 0.0
    %2103 = vmatpush1.msra.mxu0 0.0
    %2104 = vmatprep.subr.mxu0 0.0
    %2105 = vmatpush1.msra.mxu0 0.0
    %2106 = vmatprep.subr.mxu0 0.0
    %2107 = vmatpush1.msra.mxu0 0.0
    %2108 = vmatprep.subr.mxu0 0.0
    %2109 = vmatpush1.msra.mxu0 0.0
    %2110 = vmatprep.subr.mxu0 0.0
    %2111 = vmatpush1.msra.mxu0 %v2070
    %2112 = vmatprep.subr.mxu0 0.0
    %2113 = vmatpush1.msra.mxu0 %v2069
    %2114 = vmatprep.subr.mxu0 0.0
    %2115 = vmatpush2.msra.mxu0 0.0
    %2116 = vmatprep.subr.mxu0 0.0
    %2117 = vmatpush2.msra.mxu0 0.0
    %2118 = vmatprep.subr.mxu0 0.0
    %2119 = vmatpush2.msra.mxu0 0.0
    %2120 = vmatprep.subr.mxu0 0.0
    %2121 = vmatpush2.msra.mxu0 0.0
    %2122 = vmatprep.subr.mxu0 0.0
    %2123 = vmatpush2.msra.mxu0 0.0
    %2124 = vmatprep.subr.mxu0 0.0
    %2125 = vmatpush2.msra.mxu0 0.0
    %2126 = vmatprep.subr.mxu0 0.0
    %2127 = vmatpush2.msra.mxu0 0.0
    %2128 = vmatprep.subr.mxu0 0.0
    %2129 = vmatpush2.msra.mxu0 0.0
    %2130 = vmatprep.subr.mxu0 0.0
    %2131 = vmatpush2.msra.mxu0 0.0
    %2132 = vmatprep.subr.mxu0 0.0
    %2133 = vmatpush2.msra.mxu0 0.0
    %2134 = vmatprep.subr.mxu0 0.0
    %2135 = vmatpush2.msra.mxu0 0.0
    %2136 = vmatprep.subr.mxu0 0.0
    %2137 = vmatpush2.msra.mxu0 0.0
    %2138 = vmatprep.subr.mxu0 0.0
    %2139 = vmatpush2.msra.mxu0 0.0
    %2140 = vmatprep.subr.mxu0 0.0
    %2141 = vmatpush2.msra.mxu0 0.0
    %2142 = vmatprep.subr.mxu0 0.0
    %2143 = vmatpush2.msra.mxu0 0.0
    %2144 = vmatprep.subr.mxu0 0.0
    %2145 = vmatpush2.msra.mxu0 0.0
    %2146 = vmatprep.mubr.f32.mxu0 0.0
    %2147 = vmatmul.mubr.f32.gmra.mxu0 %v2080
    %v2148 = vpop.f32.mrf.mxu0
    %v2149 = vadd.f32 %v2076, %v2148
    %v2150 = vpop.f32.mrf.mxu0
    %2151 = vdwg.mxu0
    %v2152 = vmax.f32 %v2149, 0.0
    %v2153 = vld [vmem:[%s10] sm:$0xff]
    %v2154 = vld [vmem:[%s10 + $0x8] sm:$0xff]
    %v2155 = vld [vmem:[%s10 + $0x10] sm:$0xff]
    %v2156 = vld [vmem:[%s10 + $0x18] sm:$0xff]
    %v2157 = vld [vmem:[%s11] sm:$0x1]
    %v2159 = vlaneseq
    %v2160 = vshrl.u32 %v2159, 7
    %v2161 = vsub.s32 0, %v2160
    %v2162 = vrot.slane %v2157, %v2161
    %vm2164 = vcmask 261120
    %v2166 = vsel %vm2164, %v2152, 0
    %2168 = vmatprep.subr.mxu0 0.0
    %2169 = vmatpush1.msra.mxu0 0.0
    %2170 = vmatprep.subr.mxu0 0.0
    %2171 = vmatpush1.msra.mxu0 0.0
    %2172 = vmatprep.subr.mxu0 0.0
    %2173 = vmatpush1.msra.mxu0 0.0
    %2174 = vmatprep.subr.mxu0 0.0
    %2175 = vmatpush1.msra.mxu0 0.0
    %2176 = vmatprep.subr.mxu0 0.0
    %2177 = vmatpush1.msra.mxu0 0.0
    %2178 = vmatprep.subr.mxu0 0.0
    %2179 = vmatpush1.msra.mxu0 0.0
    %2180 = vmatprep.subr.mxu0 0.0
    %2181 = vmatpush1.msra.mxu0 0.0
    %2182 = vmatprep.subr.mxu0 0.0
    %2183 = vmatpush1.msra.mxu0 0.0
    %2184 = vmatprep.subr.mxu0 0.0
    %2185 = vmatpush1.msra.mxu0 0.0
    %2186 = vmatprep.subr.mxu0 0.0
    %2187 = vmatpush1.msra.mxu0 0.0
    %2188 = vmatprep.subr.mxu0 0.0
    %2189 = vmatpush1.msra.mxu0 0.0
    %2190 = vmatprep.subr.mxu0 0.0
    %2191 = vmatpush1.msra.mxu0 0.0
    %2192 = vmatprep.subr.mxu0 0.0
    %2193 = vmatpush1.msra.mxu0 %v2156
    %2194 = vmatprep.subr.mxu0 0.0
    %2195 = vmatpush1.msra.mxu0 %v2155
    %2196 = vmatprep.subr.mxu0 0.0
    %2197 = vmatpush1.msra.mxu0 %v2154
    %2198 = vmatprep.subr.mxu0 0.0
    %2199 = vmatpush1.msra.mxu0 %v2153
    %2200 = vmatprep.subr.mxu0 0.0
    %2201 = vmatpush2.msra.mxu0 0.0
    %2202 = vmatprep.subr.mxu0 0.0
    %2203 = vmatpush2.msra.mxu0 0.0
    %2204 = vmatprep.subr.mxu0 0.0
    %2205 = vmatpush2.msra.mxu0 0.0
    %2206 = vmatprep.subr.mxu0 0.0
    %2207 = vmatpush2.msra.mxu0 0.0
    %2208 = vmatprep.subr.mxu0 0.0
    %2209 = vmatpush2.msra.mxu0 0.0
    %2210 = vmatprep.subr.mxu0 0.0
    %2211 = vmatpush2.msra.mxu0 0.0
    %2212 = vmatprep.subr.mxu0 0.0
    %2213 = vmatpush2.msra.mxu0 0.0
    %2214 = vmatprep.subr.mxu0 0.0
    %2215 = vmatpush2.msra.mxu0 0.0
    %2216 = vmatprep.subr.mxu0 0.0
    %2217 = vmatpush2.msra.mxu0 0.0
    %2218 = vmatprep.subr.mxu0 0.0
    %2219 = vmatpush2.msra.mxu0 0.0
    %2220 = vmatprep.subr.mxu0 0.0
    %2221 = vmatpush2.msra.mxu0 0.0
    %2222 = vmatprep.subr.mxu0 0.0
    %2223 = vmatpush2.msra.mxu0 0.0
    %2224 = vmatprep.subr.mxu0 0.0
    %2225 = vmatpush2.msra.mxu0 0.0
    %2226 = vmatprep.subr.mxu0 0.0
    %2227 = vmatpush2.msra.mxu0 0.0
    %2228 = vmatprep.subr.mxu0 0.0
    %2229 = vmatpush2.msra.mxu0 0.0
    %2230 = vmatprep.subr.mxu0 0.0
    %2231 = vmatpush2.msra.mxu0 0.0
    %2232 = vmatprep.mubr.f32.mxu0 0.0
    %2233 = vmatmul.mubr.f32.gmra.mxu0 %v2166
    %v2234 = vpop.f32.mrf.mxu0
    %v2235 = vadd.f32 %v2162, %v2234
    %v2236 = vpop.f32.mrf.mxu0
    %2237 = vdwg.mxu0
    %v2238 = vmax.f32 %v2235, 0.0
    %v2239 = vld [vmem:[%s12] sm:$0xff]
    %v2240 = vld [vmem:[%s12 + $0x8] sm:$0xff]
    %v2241 = vld [vmem:[%s13] sm:$0x1]
    %v2243 = vlaneseq
    %v2244 = vshrl.u32 %v2243, 7
    %v2245 = vsub.s32 0, %v2244
    %v2246 = vrot.slane %v2241, %v2245
    %v2249 = vsel %vm2078, %v2238, 0
    %2251 = vmatprep.subr.mxu0 0.0
    %2252 = vmatpush1.msra.mxu0 0.0
    %2253 = vmatprep.subr.mxu0 0.0
    %2254 = vmatpush1.msra.mxu0 0.0
    %2255 = vmatprep.subr.mxu0 0.0
    %2256 = vmatpush1.msra.mxu0 0.0
    %2257 = vmatprep.subr.mxu0 0.0
    %2258 = vmatpush1.msra.mxu0 0.0
    %2259 = vmatprep.subr.mxu0 0.0
    %2260 = vmatpush1.msra.mxu0 0.0
    %2261 = vmatprep.subr.mxu0 0.0
    %2262 = vmatpush1.msra.mxu0 0.0
    %2263 = vmatprep.subr.mxu0 0.0
    %2264 = vmatpush1.msra.mxu0 0.0
    %2265 = vmatprep.subr.mxu0 0.0
    %2266 = vmatpush1.msra.mxu0 0.0
    %2267 = vmatprep.subr.mxu0 0.0
    %2268 = vmatpush1.msra.mxu0 0.0
    %2269 = vmatprep.subr.mxu0 0.0
    %2270 = vmatpush1.msra.mxu0 0.0
    %2271 = vmatprep.subr.mxu0 0.0
    %2272 = vmatpush1.msra.mxu0 0.0
    %2273 = vmatprep.subr.mxu0 0.0
    %2274 = vmatpush1.msra.mxu0 0.0
    %2275 = vmatprep.subr.mxu0 0.0
    %2276 = vmatpush1.msra.mxu0 0.0
    %2277 = vmatprep.subr.mxu0 0.0
    %2278 = vmatpush1.msra.mxu0 0.0
    %2279 = vmatprep.subr.mxu0 0.0
    %2280 = vmatpush1.msra.mxu0 %v2240
    %2281 = vmatprep.subr.mxu0 0.0
    %2282 = vmatpush1.msra.mxu0 %v2239
    %2283 = vmatprep.subr.mxu0 0.0
    %2284 = vmatpush2.msra.mxu0 0.0
    %2285 = vmatprep.subr.mxu0 0.0
    %2286 = vmatpush2.msra.mxu0 0.0
    %2287 = vmatprep.subr.mxu0 0.0
    %2288 = vmatpush2.msra.mxu0 0.0
    %2289 = vmatprep.subr.mxu0 0.0
    %2290 = vmatpush2.msra.mxu0 0.0
    %2291 = vmatprep.subr.mxu0 0.0
    %2292 = vmatpush2.msra.mxu0 0.0
    %2293 = vmatprep.subr.mxu0 0.0
    %2294 = vmatpush2.msra.mxu0 0.0
    %2295 = vmatprep.subr.mxu0 0.0
    %2296 = vmatpush2.msra.mxu0 0.0
    %2297 = vmatprep.subr.mxu0 0.0
    %2298 = vmatpush2.msra.mxu0 0.0
    %2299 = vmatprep.subr.mxu0 0.0
    %2300 = vmatpush2.msra.mxu0 0.0
    %2301 = vmatprep.subr.mxu0 0.0
    %2302 = vmatpush2.msra.mxu0 0.0
    %2303 = vmatprep.subr.mxu0 0.0
    %2304 = vmatpush2.msra.mxu0 0.0
    %2305 = vmatprep.subr.mxu0 0.0
    %2306 = vmatpush2.msra.mxu0 0.0
    %2307 = vmatprep.subr.mxu0 0.0
    %2308 = vmatpush2.msra.mxu0 0.0
    %2309 = vmatprep.subr.mxu0 0.0
    %2310 = vmatpush2.msra.mxu0 0.0
    %2311 = vmatprep.subr.mxu0 0.0
    %2312 = vmatpush2.msra.mxu0 0.0
    %2313 = vmatprep.subr.mxu0 0.0
    %2314 = vmatpush2.msra.mxu0 0.0
    %2315 = vmatprep.mubr.f32.mxu0 0.0
    %2316 = vmatmul.mubr.f32.gmra.mxu0 %v2249
    %v2317 = vpop.f32.mrf.mxu0
    %v2318 = vadd.f32 %v2246, %v2317
    %v2319 = vpop.f32.mrf.mxu0
    %2320 = vdwg.mxu0
    %v2321 = vmax.f32 %v2318, 0.0
    %v2322 = vld [vmem:[%s14] sm:$0xff]
    %v2323 = vld [vmem:[%s15] sm:$0x1]
    %v2325 = vlaneseq
    %v2326 = vshrl.u32 %v2325, 7
    %v2327 = vsub.s32 0, %v2326
    %v2328 = vrot.slane %v2323, %v2327
    %v2331 = vsel %vm1235, %v2321, 0
    %2333 = vmatprep.subr.mxu0 0.0
    %2334 = vmatpush1.msra.mxu0 0.0
    %2335 = vmatprep.subr.mxu0 0.0
    %2336 = vmatpush1.msra.mxu0 0.0
    %2337 = vmatprep.subr.mxu0 0.0
    %2338 = vmatpush1.msra.mxu0 0.0
    %2339 = vmatprep.subr.mxu0 0.0
    %2340 = vmatpush1.msra.mxu0 0.0
    %2341 = vmatprep.subr.mxu0 0.0
    %2342 = vmatpush1.msra.mxu0 0.0
    %2343 = vmatprep.subr.mxu0 0.0
    %2344 = vmatpush1.msra.mxu0 0.0
    %2345 = vmatprep.subr.mxu0 0.0
    %2346 = vmatpush1.msra.mxu0 0.0
    %2347 = vmatprep.subr.mxu0 0.0
    %2348 = vmatpush1.msra.mxu0 0.0
    %2349 = vmatprep.subr.mxu0 0.0
    %2350 = vmatpush1.msra.mxu0 0.0
    %2351 = vmatprep.subr.mxu0 0.0
    %2352 = vmatpush1.msra.mxu0 0.0
    %2353 = vmatprep.subr.mxu0 0.0
    %2354 = vmatpush1.msra.mxu0 0.0
    %2355 = vmatprep.subr.mxu0 0.0
    %2356 = vmatpush1.msra.mxu0 0.0
    %2357 = vmatprep.subr.mxu0 0.0
    %2358 = vmatpush1.msra.mxu0 0.0
    %2359 = vmatprep.subr.mxu0 0.0
    %2360 = vmatpush1.msra.mxu0 0.0
    %2361 = vmatprep.subr.mxu0 0.0
    %2362 = vmatpush1.msra.mxu0 0.0
    %2363 = vmatprep.subr.mxu0 0.0
    %2364 = vmatpush1.msra.mxu0 %v2322
    %2365 = vmatprep.subr.mxu0 0.0
    %2366 = vmatpush2.msra.mxu0 0.0
    %2367 = vmatprep.subr.mxu0 0.0
    %2368 = vmatpush2.msra.mxu0 0.0
    %2369 = vmatprep.subr.mxu0 0.0
    %2370 = vmatpush2.msra.mxu0 0.0
    %2371 = vmatprep.subr.mxu0 0.0
    %2372 = vmatpush2.msra.mxu0 0.0
    %2373 = vmatprep.subr.mxu0 0.0
    %2374 = vmatpush2.msra.mxu0 0.0
    %2375 = vmatprep.subr.mxu0 0.0
    %2376 = vmatpush2.msra.mxu0 0.0
    %2377 = vmatprep.subr.mxu0 0.0
    %2378 = vmatpush2.msra.mxu0 0.0
    %2379 = vmatprep.subr.mxu0 0.0
    %2380 = vmatpush2.msra.mxu0 0.0
    %2381 = vmatprep.subr.mxu0 0.0
    %2382 = vmatpush2.msra.mxu0 0.0
    %2383 = vmatprep.subr.mxu0 0.0
    %2384 = vmatpush2.msra.mxu0 0.0
    %2385 = vmatprep.subr.mxu0 0.0
    %2386 = vmatpush2.msra.mxu0 0.0
    %2387 = vmatprep.subr.mxu0 0.0
    %2388 = vmatpush2.msra.mxu0 0.0
    %2389 = vmatprep.subr.mxu0 0.0
    %2390 = vmatpush2.msra.mxu0 0.0
    %2391 = vmatprep.subr.mxu0 0.0
    %2392 = vmatpush2.msra.mxu0 0.0
    %2393 = vmatprep.subr.mxu0 0.0
    %2394 = vmatpush2.msra.mxu0 0.0
    %2395 = vmatprep.subr.mxu0 0.0
    %2396 = vmatpush2.msra.mxu0 0.0
    %2397 = vmatprep.mubr.f32.mxu0 0.0
    %2398 = vmatmul.mubr.f32.gmra.mxu0 %v2331
    %v2399 = vpop.f32.mrf.mxu0
    %v2400 = vadd.f32 %v2328, %v2399
    %v2401 = vpop.f32.mrf.mxu0
    %2402 = vdwg.mxu0
    %vm2403 = vcmask 25600
    %v2404 = vsel %vm2403, %v2400, -inf
    %2405 = vmax.xlane.f32.xlu0 %v2404
    %v2406 = vpop.xlane.xlu0 %2405
    %v2407 = vsub.f32 %v2400, %v2406
    %v2408 = vmul.f32 %v2407, 1.442695
    %v2409 = vpow.pop %v2408
    %v2410 = vsel %vm2403, %v2409, 0.0
    %2411 = vadd.xlane.f32.xlu0 %v2410
    %v2412 = vpop.xlane.xlu0 %2411
    %v2413 = vlog2.pop %v2412
    %v2414 = vmul.f32 %v2413, 0.6931472
    %v2415 = vsub.f32 %v2407, %v2414
    %2416 = vst.msk [vmem:[#allocation4] sm:$0x3] %vm2403, %v2415
    // Predicated region
    $region66: #{struct_ddi_forward.1} parent=1 // pred_check
      _
    $region67: #{struct_ddi_forward.1} parent=1 // pred_check_branch
      %2418 = sbr.rel (0) target = $region69
    $region68: #{struct_ddi_forward.1} parent=1 // pred_region
      %s2420 = ssub.s32 32, 32
      %2421 = vsyncadd [#allocation5], %s2420
      %s2423 = sshll.u32 [#allocation4], 4
      %s2424 = int_to_ptr.vmem [resolvable:$true] %s2423
      %2426 = dma.vmem_to_hbm [thread:$0]  %s2424, 32, %s16, [#allocation5]
    $region69: #{struct_ddi_forward.1} parent=1 // pred_fallthru
      _
    // Predicated region
    $region70: #{struct_ddi_forward.1} parent=1 // pred_check
      _
    $region71: #{struct_ddi_forward.1} parent=1 // pred_check_branch
      %2428 = sbr.rel (0) target = $region73
    $region72: #{struct_ddi_forward.1} parent=1 // pred_region
      %2429 = dma.done [#allocation5], 32
    $region73: #{struct_ddi_forward.1} parent=1 // pred_fallthru
      _
    %2430 = vsyncpa [#allocation5], 1

</llo_original>
